<compile_context>
chip_gen: v7x
topology: tpu7x:2x2x1
jax: 0.10.0
libtpu: 0.0.40
codegen_flags: <defaults>
</compile_context>

<pallas_src>
import jax
import jax.numpy as jnp
from jax import lax
from jax.experimental import pallas as pl
from jax.experimental.pallas import tpu as pltpu


# ---------------------------------------------------------------------------
# Fused kernel: QKV projection + causal softmax(q k^T) + @ v, one grid step
# per (batch, q-tile) with the full kv sequence resident.
# ---------------------------------------------------------------------------
def _fused_head_kernel(xq_ref, xkv_ref, wq_ref, wk_ref, wv_ref, o_ref):
    qi = pl.program_id(1)
    tq = xq_ref.shape[1]

    x_q = xq_ref[0]     # (tq, C) bf16 — rows of this q tile
    x_kv = xkv_ref[0]   # (T,  C) bf16 — full sequence (resident across qi)

    # Projections on the MXU, f32 accumulation.  The softmax scale is already
    # folded into wq (done once in prepare_head_params).
    q = jnp.dot(x_q, wq_ref[...], preferred_element_type=jnp.float32)   # (tq, H)
    k = jnp.dot(x_kv, wk_ref[...], preferred_element_type=jnp.float32)  # (T,  H)
    v = jnp.dot(x_kv, wv_ref[...], preferred_element_type=jnp.float32)  # (T,  H)

    # Scores: contract over H directly (no materialized transpose), bf16 MXU
    # inputs with f32 accumulation.
    s = lax.dot_general(
        q.astype(jnp.bfloat16), k.astype(jnp.bfloat16),
        (((1,), (1,)), ((), ())), preferred_element_type=jnp.float32,
    )  # (tq, T) f32

    # Causal mask with global row indices (single path; the iota/compare/
    # select is VPU filler under the EUP-bound exp).
    row = lax.broadcasted_iota(jnp.int32, s.shape, 0) + qi * tq
    col = lax.broadcasted_iota(jnp.int32, s.shape, 1)
    s = jnp.where(col <= row, s, -jnp.inf)

    # Full-row softmax in f32 (v5e-safe).  Every row has col == 0 unmasked,
    # so the max is always finite and no -inf arithmetic can NaN.
    m = jnp.max(s, axis=-1, keepdims=True)
    p = jnp.exp(s - m)
    l = jnp.sum(p, axis=-1, keepdims=True)
    inv = pl.reciprocal(l, approx=True)     # (tq, 1), EUP

    out = jnp.dot(
        p.astype(jnp.bfloat16), v.astype(jnp.bfloat16),
        preferred_element_type=jnp.float32,
    )  # (tq, H) f32
    o_ref[0] = (out * inv).astype(o_ref.dtype)


def _q_tile(T):
    return 128 if T % 128 == 0 else T


def head_attention(x_lp, w_q, w_k, w_v, out_dtype):
    """x_lp: (B, T, C) bf16; w_*: (C, H) bf16 (scale folded into w_q).
    Returns (B, T, H) in out_dtype."""
    B, T, C = x_lp.shape
    H = w_q.shape[1]
    tq = _q_tile(T)
    nq = T // tq

    return pl.pallas_call(
        _fused_head_kernel,
        out_shape=jax.ShapeDtypeStruct((B, T, H), out_dtype),
        grid_spec=pltpu.PrefetchScalarGridSpec(
            num_scalar_prefetch=0,
            grid=(B, nq),
            in_specs=[
                # q-tile rows of x
                pl.BlockSpec((1, tq, C), lambda b, qi: (b, qi, 0)),
                # full sequence of x (same block across qi -> DMA'd once per b)
                pl.BlockSpec((1, T, C), lambda b, qi: (b, 0, 0)),
                pl.BlockSpec((C, H), lambda b, qi: (0, 0)),
                pl.BlockSpec((C, H), lambda b, qi: (0, 0)),
                pl.BlockSpec((C, H), lambda b, qi: (0, 0)),
            ],
            out_specs=pl.BlockSpec((1, tq, H), lambda b, qi: (b, qi, 0)),
        ),
        compiler_params=pltpu.CompilerParams(
            dimension_semantics=("parallel", "parallel"),
        ),
    )(x_lp, x_lp, w_q, w_k, w_v)


# ---------------------------------------------------------------------------
# One-time parameter prep + forward wrapper
# ---------------------------------------------------------------------------
def prepare_head_params(w_key, w_query, w_value, n_embed, mxu_dtype=jnp.bfloat16):
    """Fold the softmax scale (n_embed ** -0.5, matching the PyTorch code's
    C ** -0.5) into the query weight and cast weights to the MXU dtype.
    Call once, not per forward."""
    scale = float(n_embed) ** -0.5
    w_q = (w_query.astype(jnp.float32) * scale).astype(mxu_dtype)
    w_k = w_key.astype(mxu_dtype)
    w_v = w_value.astype(mxu_dtype)
    return w_q, w_k, w_v


def head_forward(x, w_q, w_k, w_v):
    """x: (B, T, C); w_*: prepared (C, H) weights.  Returns (B, T, H)."""
    x_lp = x.astype(w_q.dtype)
    return head_attention(x_lp, w_q, w_k, w_v, out_dtype=x.dtype)


def head_reference(x, w_key, w_query, w_value):
    """Pure-JAX f32 reference matching the PyTorch forward."""
    B, T, C = x.shape
    k = x @ w_key
    q = x @ w_query
    v = x @ w_value
    wei = jnp.einsum("btd,bsd->bts", q, k) * (C ** -0.5)
    tril = jnp.tril(jnp.ones((T, T), dtype=bool))
    wei = jnp.where(tril, wei, -jnp.inf)
    wei = jax.nn.softmax(wei, axis=-1)
    return wei @ v


if __name__ == "__main__":
    # Shapes implied by the module: T <= block_size (256), C = n_embed (384),
    # head_size = 64 (n_embed / 6 heads), small batch.
    B, T, C, H = 2, 256, 384, 64

    key = jax.random.PRNGKey(0)
    kx, kk, kq, kv = jax.random.split(key, 4)

    x = jax.random.normal(kx, (B, T, C), dtype=jnp.float32)
    bound = 1.0 / (C ** 0.5)  # nn.Linear-style uniform init, no bias
    w_key = jax.random.uniform(kk, (C, H), jnp.float32, -bound, bound)
    w_query = jax.random.uniform(kq, (C, H), jnp.float32, -bound, bound)
    w_value = jax.random.uniform(kv, (C, H), jnp.float32, -bound, bound)

    # One-time parameter prep (scale fold + bf16 cast), then the fused kernel.
    w_q, w_k, w_v = prepare_head_params(w_key, w_query, w_value, n_embed=C)
    out = head_forward(x, w_q, w_k, w_v)
    out = jax.block_until_ready(out)

    ref = head_reference(x, w_key, w_query, w_value)
    assert out.shape == (B, T, H)
    max_err = float(jnp.max(jnp.abs(out - ref)))
    # bf16 MXU inputs (x, W, q/k/v, p) bound the error vs the f32 reference to
    # ~1e-2; softmax arithmetic stays in f32.
    assert jnp.allclose(out, ref, atol=3e-2, rtol=3e-2), (
        f"mismatch vs reference, max abs err = {max_err}"
    )

    print("KERNEL_OK")
</pallas_src>

<mosaic_0001>
module attributes {stable_mosaic.version = 11 : i64} {
  func.func @_fused_head_kernel(%arg0: i32, %arg1: i32, %arg2: memref<1x128x384xbf16, #tpu.memory_space<vmem>>, %arg3: memref<1x256x384xbf16, #tpu.memory_space<vmem>>, %arg4: memref<384x64xbf16, #tpu.memory_space<vmem>>, %arg5: memref<384x64xbf16, #tpu.memory_space<vmem>>, %arg6: memref<384x64xbf16, #tpu.memory_space<vmem>>, %arg7: memref<1x128x64xf32, #tpu.memory_space<vmem>>) attributes {dimension_semantics = [#tpu.dimension_semantics<parallel>, #tpu.dimension_semantics<parallel>], iteration_bounds = array<i64: 2, 2>, scalar_prefetch = 0 : i64, scratch_operands = 0 : i64, tpu.core_type = #tpu.core_type<tc>, window_params = [{transform_indices = @transform_0, window_bounds = array<i64: 1, 128, 384>}, {transform_indices = @transform_1, window_bounds = array<i64: 1, 256, 384>}, {pipeline_mode = #tpu.pipeline_mode<synchronous>, transform_indices = @transform_2, window_bounds = array<i64: 384, 64>}, {pipeline_mode = #tpu.pipeline_mode<synchronous>, transform_indices = @transform_3, window_bounds = array<i64: 384, 64>}, {pipeline_mode = #tpu.pipeline_mode<synchronous>, transform_indices = @transform_4, window_bounds = array<i64: 384, 64>}, {transform_indices = @transform_5, window_bounds = array<i64: 1, 128, 64>}]} {
    %c0 = arith.constant 0 : index
    %c0_0 = arith.constant 0 : index
    %c0_1 = arith.constant 0 : index
    %0 = vector.load %arg2[%c0, %c0_0, %c0_1] : memref<1x128x384xbf16, #tpu.memory_space<vmem>>, vector<1x128x384xbf16>
    %1 = vector.shape_cast %0 : vector<1x128x384xbf16> to vector<128x384xbf16>
    %c0_2 = arith.constant 0 : index
    %c0_3 = arith.constant 0 : index
    %c0_4 = arith.constant 0 : index
    %2 = vector.load %arg3[%c0_2, %c0_3, %c0_4] : memref<1x256x384xbf16, #tpu.memory_space<vmem>>, vector<1x256x384xbf16>
    %3 = vector.shape_cast %2 : vector<1x256x384xbf16> to vector<256x384xbf16>
    %c0_5 = arith.constant 0 : index
    %c0_6 = arith.constant 0 : index
    %4 = vector.load %arg4[%c0_5, %c0_6] : memref<384x64xbf16, #tpu.memory_space<vmem>>, vector<384x64xbf16>
    %cst = arith.constant dense<0.000000e+00> : vector<128x64xf32>
    %5 = tpu.matmul %1, %4, %cst {dimension_numbers = #tpu.dot_dimension_numbers<[1], [0], [0], [1], [0, 0, 1, 1], [], []>} : vector<128x384xbf16>, vector<384x64xbf16>, vector<128x64xf32> -> vector<128x64xf32>
    %c0_7 = arith.constant 0 : index
    %c0_8 = arith.constant 0 : index
    %6 = vector.load %arg5[%c0_7, %c0_8] : memref<384x64xbf16, #tpu.memory_space<vmem>>, vector<384x64xbf16>
    %cst_9 = arith.constant dense<0.000000e+00> : vector<256x64xf32>
    %7 = tpu.matmul %3, %6, %cst_9 {dimension_numbers = #tpu.dot_dimension_numbers<[1], [0], [0], [1], [0, 0, 1, 1], [], []>} : vector<256x384xbf16>, vector<384x64xbf16>, vector<256x64xf32> -> vector<256x64xf32>
    %c0_10 = arith.constant 0 : index
    %c0_11 = arith.constant 0 : index
    %8 = vector.load %arg6[%c0_10, %c0_11] : memref<384x64xbf16, #tpu.memory_space<vmem>>, vector<384x64xbf16>
    %cst_12 = arith.constant dense<0.000000e+00> : vector<256x64xf32>
    %9 = tpu.matmul %3, %8, %cst_12 {dimension_numbers = #tpu.dot_dimension_numbers<[1], [0], [0], [1], [0, 0, 1, 1], [], []>} : vector<256x384xbf16>, vector<384x64xbf16>, vector<256x64xf32> -> vector<256x64xf32>
    %10 = arith.truncf %5 : vector<128x64xf32> to vector<128x64xbf16>
    %11 = arith.truncf %7 : vector<256x64xf32> to vector<256x64xbf16>
    %cst_13 = arith.constant dense<0.000000e+00> : vector<128x256xf32>
    %12 = tpu.matmul %10, %11, %cst_13 {dimension_numbers = #tpu.dot_dimension_numbers<[1], [1], [0], [0], [0, 0, 1, 0], [], []>} : vector<128x64xbf16>, vector<256x64xbf16>, vector<128x256xf32> -> vector<128x256xf32>
    %13 = tpu.iota {dimensions = array<i32: 0>} : vector<128x256xi32>
    %c128_i32 = arith.constant 128 : i32
    %14 = arith.muli %arg1, %c128_i32 : i32
    %15 = vector.broadcast %14 : i32 to vector<128x256xi32>
    %16 = arith.addi %13, %15 : vector<128x256xi32>
    %17 = tpu.iota {dimensions = array<i32: 1>} : vector<128x256xi32>
    %18 = arith.cmpi sle, %17, %16 : vector<128x256xi32>
    %cst_14 = arith.constant 0xFF800000 : f32
    %19 = vector.broadcast %cst_14 : f32 to vector<128x256xf32>
    %20 = arith.select %18, %12, %19 : vector<128x256xi1>, vector<128x256xf32>
    %cst_15 = arith.constant dense<0xFF800000> : vector<128xf32>
    %21 = vector.multi_reduction <maximumf>, %20, %cst_15 [1] : vector<128x256xf32> to vector<128xf32>
    %22 = vector.shape_cast %21 : vector<128xf32> to vector<128x1xf32>
    %23 = vector.broadcast %22 : vector<128x1xf32> to vector<128x256xf32>
    %24 = arith.subf %20, %23 : vector<128x256xf32>
    %25 = math.exp %24 : vector<128x256xf32>
    %cst_16 = arith.constant dense<0.000000e+00> : vector<128xf32>
    %26 = vector.multi_reduction <add>, %25, %cst_16 [1] : vector<128x256xf32> to vector<128xf32>
    %27 = vector.shape_cast %26 : vector<128xf32> to vector<128x1xf32>
    %28 = tpu.reciprocal %27 {approx = true} : vector<128x1xf32> -> vector<128x1xf32>
    %29 = arith.truncf %25 : vector<128x256xf32> to vector<128x256xbf16>
    %30 = arith.truncf %9 : vector<256x64xf32> to vector<256x64xbf16>
    %cst_17 = arith.constant dense<0.000000e+00> : vector<128x64xf32>
    %31 = tpu.matmul %29, %30, %cst_17 {dimension_numbers = #tpu.dot_dimension_numbers<[1], [0], [0], [1], [0, 0, 1, 1], [], []>} : vector<128x256xbf16>, vector<256x64xbf16>, vector<128x64xf32> -> vector<128x64xf32>
    %32 = vector.broadcast %28 : vector<128x1xf32> to vector<128x64xf32>
    %33 = arith.mulf %31, %32 : vector<128x64xf32>
    %c0_18 = arith.constant 0 : index
    %c0_19 = arith.constant 0 : index
    %c0_20 = arith.constant 0 : index
    %34 = vector.load %arg7[%c0_18, %c0_19, %c0_20] : memref<1x128x64xf32, #tpu.memory_space<vmem>>, vector<1x128x64xf32>
    %35 = vector.shape_cast %34 : vector<1x128x64xf32> to vector<128x64xf32>
    %36 = vector.shape_cast %33 : vector<128x64xf32> to vector<1x128x64xf32>
    tpu.vector_store %arg7[%c0_18, %c0_19, %c0_20], %36 {strides = array<i32>} : memref<1x128x64xf32, #tpu.memory_space<vmem>>, vector<1x128x64xf32>,
    return
  }
  func.func @transform_0(%arg0: i32, %arg1: i32) -> (i32, i32, i32) {
    %c0_i32 = arith.constant 0 : i32
    %c0_i32_0 = arith.constant 0 : i32
    return %arg0, %arg1, %c0_i32 : i32, i32, i32
  }
  func.func @transform_1(%arg0: i32, %arg1: i32) -> (i32, i32, i32) {
    %c0_i32 = arith.constant 0 : i32
    %c0_i32_0 = arith.constant 0 : i32
    %c0_i32_1 = arith.constant 0 : i32
    return %arg0, %c0_i32, %c0_i32_0 : i32, i32, i32
  }
  func.func @transform_2(%arg0: i32, %arg1: i32) -> (i32, i32) {
    %c0_i32 = arith.constant 0 : i32
    %c0_i32_0 = arith.constant 0 : i32
    %c0_i32_1 = arith.constant 0 : i32
    return %c0_i32, %c0_i32_0 : i32, i32
  }
  func.func @transform_3(%arg0: i32, %arg1: i32) -> (i32, i32) {
    %c0_i32 = arith.constant 0 : i32
    %c0_i32_0 = arith.constant 0 : i32
    %c0_i32_1 = arith.constant 0 : i32
    return %c0_i32, %c0_i32_0 : i32, i32
  }
  func.func @transform_4(%arg0: i32, %arg1: i32) -> (i32, i32) {
    %c0_i32 = arith.constant 0 : i32
    %c0_i32_0 = arith.constant 0 : i32
    %c0_i32_1 = arith.constant 0 : i32
    return %c0_i32, %c0_i32_0 : i32, i32
  }
  func.func @transform_5(%arg0: i32, %arg1: i32) -> (i32, i32, i32) {
    %c0_i32 = arith.constant 0 : i32
    %c0_i32_0 = arith.constant 0 : i32
    return %arg0, %arg1, %c0_i32 : i32, i32, i32
  }
}

</mosaic_0001>

<llo_original>
// kernel: tpu_custom_call.1
$region0: #{tpu_custom_call.1}
  #allocation0 [shape = 'u32[]', space=smem, size = 0x4, offset = 0x4, fixed_abs, tag = 'smem constant byte address 0x4 - core index']
  #allocation1 [shape = 'u32[144,128]{1,0:T(1,128)}', space=vmem, size = 0x12000, scoped, tag = 'internal scratch']
  %s0 = inlined_call_operand.vmem [shape: bf16[2,256,384], index: 0, kind: input, shape index: {}]
  %s1 = inlined_call_operand.hbm [shape: bf16[2,256,384], index: 1, kind: input, shape index: {}]
  %s2 = inlined_call_operand.vmem [shape: bf16[384,64], index: 2, kind: input, shape index: {}]
  %s3 = inlined_call_operand.vmem [shape: bf16[384,64], index: 3, kind: input, shape index: {}]
  %s4 = inlined_call_operand.vmem [shape: bf16[384,64], index: 4, kind: input, shape index: {}]
  %s5 = inlined_call_operand.vmem [shape: f32[2,256,64], index: 5, kind: output, shape index: {}]
  %s6 = sld [smem:[#allocation0]]
  $region57: #{tpu_custom_call.1} parent=0
    _
  %s8 = ssub.s32 1, %s6
  %s9 = scalar_select 0, %s8, %s6
  $region1: #{tpu_custom_call.1} parent=0
    #allocation2 [shape = 'u8[393216]{0}', space=vmem, size = 0x60000, scoped, tag = 'input window, operand 1']
    #allocation3 [shape = 's32[2]{0}', space=sflag, size = 0x8, scoped, tag = 'scoped memory for tpu_custom_call.1']
    %10 = vsyncpa [#allocation3], 0
    %s11 = scalar_lea.sflag [#allocation3], 1
    %12 = vsyncpa %s11, 0
    loop: start=0, step=1, limit=6
    $region2: #{tpu_custom_call.1} parent=1 // loop_pre_header
      _
    $region3: #{tpu_custom_call.1} parent=1 // loop_header
      %s14 = sphi 0, %s18
      %p15 = scmp.ge.s32.totalorder %s14, 6
      %s21 = sphi 0, %s33
      %s22 = sphi 0, %s29
      %s23 = sphi 0, %s21
      %s24 = sphi 0, %s22
      %s25 = sphi 0, %s23
      %s26 = sphi 0, %s24
      %s38 = sphi 0, %s40
      %s41 = sphi 0, %s38
      %s42 = sphi 0, %s41
      %s58 = sphi 0, %s42
      %s64 = sphi 0, %s66
      %s67 = sphi 0, %s64
      %s68 = sphi 0, %s67
      %s84 = sphi 0, %s68
      %s88 = sphi 0, %s88
      %s90 = sphi 0, %s88
      %s91 = sphi 0, %s90
      %s105 = sphi 0, %s91
      %s109 = sphi 0, %s109
      %s111 = sphi 0, %s109
      %s112 = sphi 0, %s111
      %s126 = sphi 0, %s112
      %s130 = sphi 0, %s130
      %s132 = sphi 0, %s130
      %s133 = sphi 0, %s132
      %s147 = sphi 0, %s133
      %s155 = sphi 0, %s157
      %s158 = sphi 0, %s155
      %s159 = sphi 0, %s158
      %s175 = sphi 0, %s159
    $region4: #{tpu_custom_call.1} parent=1 // loop_header_branch
      %17 = sbr.rel (%p15) target = $region8
    $region5: #{tpu_custom_call.1} parent=1 // loop_body
      %s19 = ssub.s32 %s14, 1
      %s20 = ssub.s32 %s14, 2
      %s27 = sadd.s32 1, %s22
      %p28 = scmp.ge.s32.totalorder %s27, 2
      %s29 = scalar_select %p28, 0, %s27
      %s30 = sadd.s32 1, %s21
      %s31 = scalar_select %p28, %s30, %s21
      %p32 = scmp.ge.s32.totalorder %s31, 2
      %s33 = scalar_select %p32, 0, %s31
      %s34 = ssub.s32 %s21, %s33
      %s35 = ssub.s32 %s22, %s29
      %s36 = sor.u32 %s34, %s35
      %p37 = scmp.eq.s32.totalorder %s36, 0
      %s39 = sadd.s32 %s38, 1
      %s40 = scalar_select %p37, %s38, %s39
      %p43 = pneg %p37
      %p44 = scmp.eq.s32.totalorder %s14, 3
      %p45 = por %p43, %p44
      %p46 = scmp.ne.s32.totalorder %s38, %s41
      %p47 = scmp.eq.s32.totalorder %s14, 0
      %p48 = por %p46, %p47
      %p49 = scmp.ne.s32.totalorder %s38, %s41
      %p50 = scmp.eq.s32.totalorder %s19, 3
      %p51 = por %p49, %p50
      %p52 = scmp.ne.s32.totalorder %s41, %s42
      %p53 = scmp.eq.s32.totalorder %s19, 0
      %p54 = por %p52, %p53
      %p55 = scmp.ne.s32.totalorder %s41, %s42
      %p56 = scmp.eq.s32.totalorder %s20, 3
      %p57 = por %p55, %p56
      %p59 = scmp.ne.s32.totalorder %s42, %s58
      %p60 = scmp.eq.s32.totalorder %s20, 0
      %p61 = por %p59, %p60
      %s62 = ssub.s32 %s21, %s33
      %p63 = scmp.eq.s32.totalorder %s62, 0
      %s65 = sadd.s32 %s64, 1
      %s66 = scalar_select %p63, %s64, %s65
      %p69 = pneg %p63
      %p70 = scmp.eq.s32.totalorder %s14, 3
      %p71 = por %p69, %p70
      %p72 = scmp.ne.s32.totalorder %s64, %s67
      %p73 = scmp.eq.s32.totalorder %s14, 0
      %p74 = por %p72, %p73
      %p75 = scmp.ne.s32.totalorder %s64, %s67
      %p76 = scmp.eq.s32.totalorder %s19, 3
      %p77 = por %p75, %p76
      %p78 = scmp.ne.s32.totalorder %s67, %s68
      %p79 = scmp.eq.s32.totalorder %s19, 0
      %p80 = por %p78, %p79
      %p81 = scmp.ne.s32.totalorder %s67, %s68
      %p82 = scmp.eq.s32.totalorder %s20, 3
      %p83 = por %p81, %p82
      %p85 = scmp.ne.s32.totalorder %s68, %s84
      %p86 = scmp.eq.s32.totalorder %s20, 0
      %p87 = por %p85, %p86
      %s89 = sadd.s32 %s88, 1
      %p92 = scmp.eq.s32.totalorder %s14, 3
      %p93 = scmp.ne.s32.totalorder %s88, %s90
      %p94 = scmp.eq.s32.totalorder %s14, 0
      %p95 = por %p93, %p94
      %p96 = scmp.ne.s32.totalorder %s88, %s90
      %p97 = scmp.eq.s32.totalorder %s19, 3
      %p98 = por %p96, %p97
      %p99 = scmp.ne.s32.totalorder %s90, %s91
      %p100 = scmp.eq.s32.totalorder %s19, 0
      %p101 = por %p99, %p100
      %p102 = scmp.ne.s32.totalorder %s90, %s91
      %p103 = scmp.eq.s32.totalorder %s20, 3
      %p104 = por %p102, %p103
      %p106 = scmp.ne.s32.totalorder %s91, %s105
      %p107 = scmp.eq.s32.totalorder %s20, 0
      %p108 = por %p106, %p107
      %s110 = sadd.s32 %s109, 1
      %p113 = scmp.eq.s32.totalorder %s14, 3
      %p114 = scmp.ne.s32.totalorder %s109, %s111
      %p115 = scmp.eq.s32.totalorder %s14, 0
      %p116 = por %p114, %p115
      %p117 = scmp.ne.s32.totalorder %s109, %s111
      %p118 = scmp.eq.s32.totalorder %s19, 3
      %p119 = por %p117, %p118
      %p120 = scmp.ne.s32.totalorder %s111, %s112
      %p121 = scmp.eq.s32.totalorder %s19, 0
      %p122 = por %p120, %p121
      %p123 = scmp.ne.s32.totalorder %s111, %s112
      %p124 = scmp.eq.s32.totalorder %s20, 3
      %p125 = por %p123, %p124
      %p127 = scmp.ne.s32.totalorder %s112, %s126
      %p128 = scmp.eq.s32.totalorder %s20, 0
      %p129 = por %p127, %p128
      %s131 = sadd.s32 %s130, 1
      %p134 = scmp.eq.s32.totalorder %s14, 3
      %p135 = scmp.ne.s32.totalorder %s130, %s132
      %p136 = scmp.eq.s32.totalorder %s14, 0
      %p137 = por %p135, %p136
      %p138 = scmp.ne.s32.totalorder %s130, %s132
      %p139 = scmp.eq.s32.totalorder %s19, 3
      %p140 = por %p138, %p139
      %p141 = scmp.ne.s32.totalorder %s132, %s133
      %p142 = scmp.eq.s32.totalorder %s19, 0
      %p143 = por %p141, %p142
      %p144 = scmp.ne.s32.totalorder %s132, %s133
      %p145 = scmp.eq.s32.totalorder %s20, 3
      %p146 = por %p144, %p145
      %p148 = scmp.ne.s32.totalorder %s133, %s147
      %p149 = scmp.eq.s32.totalorder %s20, 0
      %p150 = por %p148, %p149
      %s151 = ssub.s32 %s21, %s33
      %s152 = ssub.s32 %s22, %s29
      %s153 = sor.u32 %s151, %s152
      %p154 = scmp.eq.s32.totalorder %s153, 0
      %s156 = sadd.s32 %s155, 1
      %s157 = scalar_select %p154, %s155, %s156
      %p160 = pneg %p154
      %p161 = scmp.eq.s32.totalorder %s14, 3
      %p162 = por %p160, %p161
      %p163 = scmp.ne.s32.totalorder %s155, %s158
      %p164 = scmp.eq.s32.totalorder %s14, 0
      %p165 = por %p163, %p164
      %p166 = scmp.ne.s32.totalorder %s155, %s158
      %p167 = scmp.eq.s32.totalorder %s19, 3
      %p168 = por %p166, %p167
      %p169 = scmp.ne.s32.totalorder %s158, %s159
      %p170 = scmp.eq.s32.totalorder %s19, 0
      %p171 = por %p169, %p170
      %p172 = scmp.ne.s32.totalorder %s158, %s159
      %p173 = scmp.eq.s32.totalorder %s20, 3
      %p174 = por %p172, %p173
      %p176 = scmp.ne.s32.totalorder %s159, %s175
      %p177 = scmp.eq.s32.totalorder %s20, 0
      %p178 = por %p176, %p177
      %p179 = scmp.le.s32.totalorder 1, %s14
      %p180 = scmp.lt.s32.totalorder %s14, 5
      %p181 = pnand %p179, %p180
      %p182 = pneg %p181
      // Predicated region
      $region9: #{tpu_custom_call.1} parent=5 // pred_check
        _
      $region10: #{tpu_custom_call.1} parent=5 // pred_check_branch
        %184 = sbr.rel (%p181) target = $region12
      $region11: #{tpu_custom_call.1} parent=5 // pred_region
        %s185 = ssub.s32 %s14, 1
        // Predicated region
        $region13: #{tpu_custom_call.1} parent=11 // pred_check
          %p186 = pneg %p101
        $region14: #{tpu_custom_call.1} parent=11 // pred_check_branch
          %188 = sbr.rel (%p186) target = $region16
        $region15: #{tpu_custom_call.1} parent=11 // pred_region
          _
        $region16: #{tpu_custom_call.1} parent=11 // pred_fallthru
          _
        // Predicated region
        $region17: #{tpu_custom_call.1} parent=11 // pred_check
          %p189 = pneg %p122
        $region18: #{tpu_custom_call.1} parent=11 // pred_check_branch
          %191 = sbr.rel (%p189) target = $region20
        $region19: #{tpu_custom_call.1} parent=11 // pred_region
          _
        $region20: #{tpu_custom_call.1} parent=11 // pred_fallthru
          _
        // Predicated region
        $region21: #{tpu_custom_call.1} parent=11 // pred_check
          %p192 = pneg %p143
        $region22: #{tpu_custom_call.1} parent=11 // pred_check_branch
          %194 = sbr.rel (%p192) target = $region24
        $region23: #{tpu_custom_call.1} parent=11 // pred_region
          _
        $region24: #{tpu_custom_call.1} parent=11 // pred_fallthru
          _
      $region12: #{tpu_custom_call.1} parent=5 // pred_fallthru
        _
      %p195 = scmp.lt.s32.totalorder %s14, 4
      // Predicated region
      $region25: #{tpu_custom_call.1} parent=5 // pred_check
        %p196 = pneg %p195
      $region26: #{tpu_custom_call.1} parent=5 // pred_check_branch
        %198 = sbr.rel (%p196) target = $region28
      $region27: #{tpu_custom_call.1} parent=5 // pred_region
        // Predicated region
        $region29: #{tpu_custom_call.1} parent=27 // pred_check
          %p199 = pneg %p48
        $region30: #{tpu_custom_call.1} parent=27 // pred_check_branch
          %201 = sbr.rel (%p199) target = $region32
        $region31: #{tpu_custom_call.1} parent=27 // pred_region
          %s202 = smul.u32 16, %s22
          %p203 = scmp.lt.s32.totalorder %s21, 1
          %s204 = scalar_select %p203, %s21, 1
          %p205 = scmp.lt.s32.totalorder %s202, 31
          %s206 = scalar_select %p205, %s202, 31
          %s207 = smul.addr %s206, 3
          %s208 = smul.addr %s204, 96
          %s209 = sadd.s32 %s207, %s208
          %s210 = smul.addr %s209, 4
          %s211 = scalar_lea.vmem %s0, %s210
          %s212 = smul.u32 16, %s22
        $region32: #{tpu_custom_call.1} parent=27 // pred_fallthru
          _
        // Predicated region
        $region33: #{tpu_custom_call.1} parent=27 // pred_check
          %p213 = pneg %p74
        $region34: #{tpu_custom_call.1} parent=27 // pred_check_branch
          %215 = sbr.rel (%p213) target = $region36
        $region35: #{tpu_custom_call.1} parent=27 // pred_region
          %s216 = sand.u32 %s64, 1
          %s217 = scalar_lea.sflag [#allocation3], %s216
          %s218 = sand.u32 %s64, 1
          %s219 = smul.addr %s218, 384
          %s220 = scalar_lea.vmem [#allocation2], %s219
          %s222 = ssub.s32 6144, 6144
          %223 = vsyncadd %s217, %s222
          %s224 = smul.addr %s21, 96
          %s225 = smul.addr %s224, 64
          %s226 = scalar_lea.hbm %s1, %s225
          %s227 = sshll.u32 %s220, 4
          %s228 = int_to_ptr.vmem [resolvable:$true] %s227
          %233 = dma.hbm_to_vmem [thread:$0]  %s226, 6144, %s228, %s217, 192, 192, 12
        $region36: #{tpu_custom_call.1} parent=27 // pred_fallthru
          _
      $region28: #{tpu_custom_call.1} parent=5 // pred_fallthru
        _
      %p234 = scmp.le.s32.totalorder 1, %s14
      %p235 = scmp.lt.s32.totalorder %s14, 5
      %p236 = pnand %p234, %p235
      %p237 = pneg %p236
      // Predicated region
      $region37: #{tpu_custom_call.1} parent=5 // pred_check
        _
      $region38: #{tpu_custom_call.1} parent=5 // pred_check_branch
        %239 = sbr.rel (%p236) target = $region40
      $region39: #{tpu_custom_call.1} parent=5 // pred_region
        %s240 = ssub.s32 %s14, 1
        %s241 = sand.u32 %s67, 1
        %s242 = scalar_lea.sflag [#allocation3], %s241
        %s243 = sand.u32 %s67, 1
        %s244 = smul.addr %s243, 384
        %s245 = scalar_lea.vmem [#allocation2], %s244
        // Predicated region
        $region41: #{tpu_custom_call.1} parent=39 // pred_check
          %p246 = pneg %p80
        $region42: #{tpu_custom_call.1} parent=39 // pred_check_branch
          %248 = sbr.rel (%p246) target = $region44
        $region43: #{tpu_custom_call.1} parent=39 // pred_region
          %249 = dma.done %s242, 6144
        $region44: #{tpu_custom_call.1} parent=39 // pred_fallthru
          _
        %s250 = smul.u32 16, %s24
        %p251 = scmp.lt.s32.totalorder %s23, 1
        %s252 = scalar_select %p251, %s23, 1
        %p253 = scmp.lt.s32.totalorder %s250, 31
        %s254 = scalar_select %p253, %s250, 31
        %s255 = smul.addr %s254, 3
        %s256 = smul.addr %s252, 96
        %s257 = sadd.s32 %s255, %s256
        %s258 = smul.addr %s257, 4
        %s259 = scalar_lea.vmem %s0, %s258
        %p260 = pneg %p54
        %p261 = pneg %p51
        %s262 = sand.u32 %s67, 1
        %s263 = scalar_lea.sflag [#allocation3], %s262
        %s264 = sand.u32 %s67, 1
        %s265 = smul.addr %s264, 384
        %s266 = scalar_lea.vmem [#allocation2], %s265
        %p267 = pneg %p80
        %p268 = pneg %p77
        %p269 = pneg %p101
        %p270 = pneg %p98
        %p271 = pneg %p122
        %p272 = pneg %p119
        %p273 = pneg %p143
        %p274 = pneg %p140
        %p275 = pneg %p171
        %p276 = pneg %p168
        %s277 = smul.u32 16, %s24
        %p278 = scmp.lt.s32.totalorder %s23, 1
        %s279 = scalar_select %p278, %s23, 1
        %p280 = scmp.lt.s32.totalorder %s277, 31
        %s281 = scalar_select %p280, %s277, 31
        %s282 = smul.addr %s279, 32
        %s283 = sadd.s32 %s281, %s282
        %s284 = smul.addr %s283, 8
        %s285 = scalar_lea.vmem %s5, %s284
        %s286 = smul.u32 16, %s24
        %p287 = scmp.lt.s32.totalorder %s23, 1
        %s288 = scalar_select %p287, %s23, 1
        %p289 = scmp.lt.s32.totalorder %s286, 31
        %s290 = scalar_select %p289, %s286, 31
        %s291 = smul.addr %s290, 3
        %s292 = smul.addr %s288, 96
        %s293 = sadd.s32 %s291, %s292
        %s294 = smul.addr %s293, 4
        %s295 = scalar_lea.vmem %s0, %s294
        %s296 = smul.u32 16, %s24
        %s297 = smul.u32 16, %s24
        %p298 = scmp.lt.s32.totalorder %s23, 1
        %s299 = scalar_select %p298, %s23, 1
        %p300 = scmp.lt.s32.totalorder %s297, 31
        %s301 = scalar_select %p300, %s297, 31
        %s302 = smul.addr %s299, 32
        %s303 = sadd.s32 %s301, %s302
        %s304 = smul.addr %s303, 8
        %s305 = scalar_lea.vmem %s5, %s304
        %s306 = smul.u32 16, %s24
        %v308 = vld [vmem:[%s295] sm:$0xff]
        %v309 = vld [vmem:[%s295 + $0x8] sm:$0xf]
        %v310 = vld [vmem:[%s295 + $0xc] sm:$0xff]
        %v311 = vld [vmem:[%s295 + $0x14] sm:$0xf]
        %v312 = vld [vmem:[%s295 + $0x18] sm:$0xff]
        %v313 = vld [vmem:[%s295 + $0x20] sm:$0xf]
        %v314 = vld [vmem:[%s295 + $0x24] sm:$0xff]
        %v315 = vld [vmem:[%s295 + $0x2c] sm:$0xf]
        %v316 = vld [vmem:[%s295 + $0x30] sm:$0xff]
        %v317 = vld [vmem:[%s295 + $0x38] sm:$0xf]
        %v318 = vld [vmem:[%s295 + $0x3c] sm:$0xff]
        %v319 = vld [vmem:[%s295 + $0x44] sm:$0xf]
        %v320 = vld [vmem:[%s295 + $0x48] sm:$0xff]
        %v321 = vld [vmem:[%s295 + $0x50] sm:$0xf]
        %v322 = vld [vmem:[%s295 + $0x54] sm:$0xff]
        %v323 = vld [vmem:[%s295 + $0x5c] sm:$0xf]
        %v324 = vld [vmem:[%s295 + $0x60] sm:$0xff]
        %v325 = vld [vmem:[%s295 + $0x68] sm:$0xf]
        %v326 = vld [vmem:[%s295 + $0x6c] sm:$0xff]
        %v327 = vld [vmem:[%s295 + $0x74] sm:$0xf]
        %v328 = vld [vmem:[%s295 + $0x78] sm:$0xff]
        %v329 = vld [vmem:[%s295 + $0x80] sm:$0xf]
        %v330 = vld [vmem:[%s295 + $0x84] sm:$0xff]
        %v331 = vld [vmem:[%s295 + $0x8c] sm:$0xf]
        %v332 = vld [vmem:[%s295 + $0x90] sm:$0xff]
        %v333 = vld [vmem:[%s295 + $0x98] sm:$0xf]
        %v334 = vld [vmem:[%s295 + $0x9c] sm:$0xff]
        %v335 = vld [vmem:[%s295 + $0xa4] sm:$0xf]
        %v336 = vld [vmem:[%s295 + $0xa8] sm:$0xff]
        %v337 = vld [vmem:[%s295 + $0xb0] sm:$0xf]
        %v338 = vld [vmem:[%s295 + $0xb4] sm:$0xff]
        %v339 = vld [vmem:[%s295 + $0xbc] sm:$0xf]
        %v340 = vld [vmem:[%s245] sm:$0xff]
        %v341 = vld [vmem:[%s245 + $0x8] sm:$0xf]
        %v342 = vld [vmem:[%s245 + $0xc] sm:$0xff]
        %v343 = vld [vmem:[%s245 + $0x14] sm:$0xf]
        %v344 = vld [vmem:[%s245 + $0x18] sm:$0xff]
        %v345 = vld [vmem:[%s245 + $0x20] sm:$0xf]
        %v346 = vld [vmem:[%s245 + $0x24] sm:$0xff]
        %v347 = vld [vmem:[%s245 + $0x2c] sm:$0xf]
        %v348 = vld [vmem:[%s245 + $0x30] sm:$0xff]
        %v349 = vld [vmem:[%s245 + $0x38] sm:$0xf]
        %v350 = vld [vmem:[%s245 + $0x3c] sm:$0xff]
        %v351 = vld [vmem:[%s245 + $0x44] sm:$0xf]
        %v352 = vld [vmem:[%s245 + $0x48] sm:$0xff]
        %v353 = vld [vmem:[%s245 + $0x50] sm:$0xf]
        %v354 = vld [vmem:[%s245 + $0x54] sm:$0xff]
        %v355 = vld [vmem:[%s245 + $0x5c] sm:$0xf]
        %v356 = vld [vmem:[%s245 + $0x60] sm:$0xff]
        %v357 = vld [vmem:[%s245 + $0x68] sm:$0xf]
        %v358 = vld [vmem:[%s245 + $0x6c] sm:$0xff]
        %v359 = vld [vmem:[%s245 + $0x74] sm:$0xf]
        %v360 = vld [vmem:[%s245 + $0x78] sm:$0xff]
        %v361 = vld [vmem:[%s245 + $0x80] sm:$0xf]
        %v362 = vld [vmem:[%s245 + $0x84] sm:$0xff]
        %v363 = vld [vmem:[%s245 + $0x8c] sm:$0xf]
        %v364 = vld [vmem:[%s245 + $0x90] sm:$0xff]
        %v365 = vld [vmem:[%s245 + $0x98] sm:$0xf]
        %v366 = vld [vmem:[%s245 + $0x9c] sm:$0xff]
        %v367 = vld [vmem:[%s245 + $0xa4] sm:$0xf]
        %v368 = vld [vmem:[%s245 + $0xa8] sm:$0xff]
        %v369 = vld [vmem:[%s245 + $0xb0] sm:$0xf]
        %v370 = vld [vmem:[%s245 + $0xb4] sm:$0xff]
        %v371 = vld [vmem:[%s245 + $0xbc] sm:$0xf]
        %v372 = vld [vmem:[%s245 + $0xc0] sm:$0xff]
        %v373 = vld [vmem:[%s245 + $0xc8] sm:$0xf]
        %v374 = vld [vmem:[%s245 + $0xcc] sm:$0xff]
        %v375 = vld [vmem:[%s245 + $0xd4] sm:$0xf]
        %v376 = vld [vmem:[%s245 + $0xd8] sm:$0xff]
        %v377 = vld [vmem:[%s245 + $0xe0] sm:$0xf]
        %v378 = vld [vmem:[%s245 + $0xe4] sm:$0xff]
        %v379 = vld [vmem:[%s245 + $0xec] sm:$0xf]
        %v380 = vld [vmem:[%s245 + $0xf0] sm:$0xff]
        %v381 = vld [vmem:[%s245 + $0xf8] sm:$0xf]
        %v382 = vld [vmem:[%s245 + $0xfc] sm:$0xff]
        %v383 = vld [vmem:[%s245 + $0x104] sm:$0xf]
        %v384 = vld [vmem:[%s245 + $0x108] sm:$0xff]
        %v385 = vld [vmem:[%s245 + $0x110] sm:$0xf]
        %v386 = vld [vmem:[%s245 + $0x114] sm:$0xff]
        %v387 = vld [vmem:[%s245 + $0x11c] sm:$0xf]
        %v388 = vld [vmem:[%s245 + $0x120] sm:$0xff]
        %v389 = vld [vmem:[%s245 + $0x128] sm:$0xf]
        %v390 = vld [vmem:[%s245 + $0x12c] sm:$0xff]
        %v391 = vld [vmem:[%s245 + $0x134] sm:$0xf]
        %v392 = vld [vmem:[%s245 + $0x138] sm:$0xff]
        %v393 = vld [vmem:[%s245 + $0x140] sm:$0xf]
        %v394 = vld [vmem:[%s245 + $0x144] sm:$0xff]
        %v395 = vld [vmem:[%s245 + $0x14c] sm:$0xf]
        %v396 = vld [vmem:[%s245 + $0x150] sm:$0xff]
        %v397 = vld [vmem:[%s245 + $0x158] sm:$0xf]
        %v398 = vld [vmem:[%s245 + $0x15c] sm:$0xff]
        %v399 = vld [vmem:[%s245 + $0x164] sm:$0xf]
        %v400 = vld [vmem:[%s245 + $0x168] sm:$0xff]
        %v401 = vld [vmem:[%s245 + $0x170] sm:$0xf]
        %v402 = vld [vmem:[%s245 + $0x174] sm:$0xff]
        %v403 = vld [vmem:[%s245 + $0x17c] sm:$0xf]
        %v404 = vld [vmem:[%s2] sm:$0xf]
        %v405 = vld [vmem:[%s2 + $0x4] sm:$0xf]
        %v406 = vld [vmem:[%s2 + $0x8] sm:$0xf]
        %v407 = vld [vmem:[%s2 + $0xc] sm:$0xf]
        %v408 = vld [vmem:[%s2 + $0x10] sm:$0xf]
        %v409 = vld [vmem:[%s2 + $0x14] sm:$0xf]
        %v410 = vld [vmem:[%s2 + $0x18] sm:$0xf]
        %v411 = vld [vmem:[%s2 + $0x1c] sm:$0xf]
        %v412 = vld [vmem:[%s2 + $0x20] sm:$0xf]
        %v413 = vld [vmem:[%s2 + $0x24] sm:$0xf]
        %v414 = vld [vmem:[%s2 + $0x28] sm:$0xf]
        %v415 = vld [vmem:[%s2 + $0x2c] sm:$0xf]
        %v416 = vld [vmem:[%s2 + $0x30] sm:$0xf]
        %v417 = vld [vmem:[%s2 + $0x34] sm:$0xf]
        %v418 = vld [vmem:[%s2 + $0x38] sm:$0xf]
        %v419 = vld [vmem:[%s2 + $0x3c] sm:$0xf]
        %v420 = vld [vmem:[%s2 + $0x40] sm:$0xf]
        %v421 = vld [vmem:[%s2 + $0x44] sm:$0xf]
        %v422 = vld [vmem:[%s2 + $0x48] sm:$0xf]
        %v423 = vld [vmem:[%s2 + $0x4c] sm:$0xf]
        %v424 = vld [vmem:[%s2 + $0x50] sm:$0xf]
        %v425 = vld [vmem:[%s2 + $0x54] sm:$0xf]
        %v426 = vld [vmem:[%s2 + $0x58] sm:$0xf]
        %v427 = vld [vmem:[%s2 + $0x5c] sm:$0xf]
        %v428 = vld [vmem:[%s2 + $0x60] sm:$0xf]
        %v429 = vld [vmem:[%s2 + $0x64] sm:$0xf]
        %v430 = vld [vmem:[%s2 + $0x68] sm:$0xf]
        %v431 = vld [vmem:[%s2 + $0x6c] sm:$0xf]
        %v432 = vld [vmem:[%s2 + $0x70] sm:$0xf]
        %v433 = vld [vmem:[%s2 + $0x74] sm:$0xf]
        %v434 = vld [vmem:[%s2 + $0x78] sm:$0xf]
        %v435 = vld [vmem:[%s2 + $0x7c] sm:$0xf]
        %v436 = vld [vmem:[%s2 + $0x80] sm:$0xf]
        %v437 = vld [vmem:[%s2 + $0x84] sm:$0xf]
        %v438 = vld [vmem:[%s2 + $0x88] sm:$0xf]
        %v439 = vld [vmem:[%s2 + $0x8c] sm:$0xf]
        %v440 = vld [vmem:[%s2 + $0x90] sm:$0xf]
        %v441 = vld [vmem:[%s2 + $0x94] sm:$0xf]
        %v442 = vld [vmem:[%s2 + $0x98] sm:$0xf]
        %v443 = vld [vmem:[%s2 + $0x9c] sm:$0xf]
        %v444 = vld [vmem:[%s2 + $0xa0] sm:$0xf]
        %v445 = vld [vmem:[%s2 + $0xa4] sm:$0xf]
        %v446 = vld [vmem:[%s2 + $0xa8] sm:$0xf]
        %v447 = vld [vmem:[%s2 + $0xac] sm:$0xf]
        %v448 = vld [vmem:[%s2 + $0xb0] sm:$0xf]
        %v449 = vld [vmem:[%s2 + $0xb4] sm:$0xf]
        %v450 = vld [vmem:[%s2 + $0xb8] sm:$0xf]
        %v451 = vld [vmem:[%s2 + $0xbc] sm:$0xf]
        %v484 = vunpack.c.l.b16 %v308
        %v485 = vunpack.c.h.b16 %v308
        %v486 = vunpack.c.l.b16 %v309
        %v487 = vunpack.c.l.b16 %v310
        %v488 = vunpack.c.h.b16 %v310
        %v489 = vunpack.c.l.b16 %v311
        %v490 = vunpack.c.l.b16 %v312
        %v491 = vunpack.c.h.b16 %v312
        %v492 = vunpack.c.l.b16 %v313
        %v493 = vunpack.c.l.b16 %v314
        %v494 = vunpack.c.h.b16 %v314
        %v495 = vunpack.c.l.b16 %v315
        %v496 = vunpack.c.l.b16 %v316
        %v497 = vunpack.c.h.b16 %v316
        %v498 = vunpack.c.l.b16 %v317
        %v499 = vunpack.c.l.b16 %v318
        %v500 = vunpack.c.h.b16 %v318
        %v501 = vunpack.c.l.b16 %v319
        %v502 = vunpack.c.l.b16 %v320
        %v503 = vunpack.c.h.b16 %v320
        %v504 = vunpack.c.l.b16 %v321
        %v505 = vunpack.c.l.b16 %v322
        %v506 = vunpack.c.h.b16 %v322
        %v507 = vunpack.c.l.b16 %v323
        %v508 = vunpack.c.l.b16 %v324
        %v509 = vunpack.c.h.b16 %v324
        %v510 = vunpack.c.l.b16 %v325
        %v511 = vunpack.c.l.b16 %v326
        %v512 = vunpack.c.h.b16 %v326
        %v513 = vunpack.c.l.b16 %v327
        %v514 = vunpack.c.l.b16 %v328
        %v515 = vunpack.c.h.b16 %v328
        %v516 = vunpack.c.l.b16 %v329
        %v517 = vunpack.c.l.b16 %v330
        %v518 = vunpack.c.h.b16 %v330
        %v519 = vunpack.c.l.b16 %v331
        %v520 = vunpack.c.l.b16 %v332
        %v521 = vunpack.c.h.b16 %v332
        %v522 = vunpack.c.l.b16 %v333
        %v523 = vunpack.c.l.b16 %v334
        %v524 = vunpack.c.h.b16 %v334
        %v525 = vunpack.c.l.b16 %v335
        %v526 = vunpack.c.l.b16 %v336
        %v527 = vunpack.c.h.b16 %v336
        %v528 = vunpack.c.l.b16 %v337
        %v529 = vunpack.c.l.b16 %v338
        %v530 = vunpack.c.h.b16 %v338
        %v531 = vunpack.c.l.b16 %v339
        %v532 = vpack.c.b16 %v487, %v484
        %v533 = vpack.c.b16 %v488, %v485
        %v534 = vpack.c.b16 %v489, %v486
        %v535 = vpack.c.b16 %v493, %v490
        %v536 = vpack.c.b16 %v494, %v491
        %v537 = vpack.c.b16 %v495, %v492
        %v538 = vpack.c.b16 %v499, %v496
        %v539 = vpack.c.b16 %v500, %v497
        %v540 = vpack.c.b16 %v501, %v498
        %v541 = vpack.c.b16 %v505, %v502
        %v542 = vpack.c.b16 %v506, %v503
        %v543 = vpack.c.b16 %v507, %v504
        %v544 = vpack.c.b16 %v511, %v508
        %v545 = vpack.c.b16 %v512, %v509
        %v546 = vpack.c.b16 %v513, %v510
        %v547 = vpack.c.b16 %v517, %v514
        %v548 = vpack.c.b16 %v518, %v515
        %v549 = vpack.c.b16 %v519, %v516
        %v550 = vpack.c.b16 %v523, %v520
        %v551 = vpack.c.b16 %v524, %v521
        %v552 = vpack.c.b16 %v525, %v522
        %v553 = vpack.c.b16 %v529, %v526
        %v554 = vpack.c.b16 %v530, %v527
        %v555 = vpack.c.b16 %v531, %v528
        %v628 = vunpack.c.l.b16 %v404
        %v629 = vunpack.c.l.b16 %v405
        %v630 = vunpack.c.l.b16 %v406
        %v631 = vunpack.c.l.b16 %v407
        %v632 = vunpack.c.l.b16 %v408
        %v633 = vunpack.c.l.b16 %v409
        %v634 = vunpack.c.l.b16 %v410
        %v635 = vunpack.c.l.b16 %v411
        %v636 = vunpack.c.l.b16 %v412
        %v637 = vunpack.c.l.b16 %v413
        %v638 = vunpack.c.l.b16 %v414
        %v639 = vunpack.c.l.b16 %v415
        %v640 = vunpack.c.l.b16 %v416
        %v641 = vunpack.c.l.b16 %v417
        %v642 = vunpack.c.l.b16 %v418
        %v643 = vunpack.c.l.b16 %v419
        %v644 = vunpack.c.l.b16 %v420
        %v645 = vunpack.c.l.b16 %v421
        %v646 = vunpack.c.l.b16 %v422
        %v647 = vunpack.c.l.b16 %v423
        %v648 = vunpack.c.l.b16 %v424
        %v649 = vunpack.c.l.b16 %v425
        %v650 = vunpack.c.l.b16 %v426
        %v651 = vunpack.c.l.b16 %v427
        %v652 = vunpack.c.l.b16 %v428
        %v653 = vunpack.c.l.b16 %v429
        %v654 = vunpack.c.l.b16 %v430
        %v655 = vunpack.c.l.b16 %v431
        %v656 = vunpack.c.l.b16 %v432
        %v657 = vunpack.c.l.b16 %v433
        %v658 = vunpack.c.l.b16 %v434
        %v659 = vunpack.c.l.b16 %v435
        %v660 = vunpack.c.l.b16 %v436
        %v661 = vunpack.c.l.b16 %v437
        %v662 = vunpack.c.l.b16 %v438
        %v663 = vunpack.c.l.b16 %v439
        %v664 = vunpack.c.l.b16 %v440
        %v665 = vunpack.c.l.b16 %v441
        %v666 = vunpack.c.l.b16 %v442
        %v667 = vunpack.c.l.b16 %v443
        %v668 = vunpack.c.l.b16 %v444
        %v669 = vunpack.c.l.b16 %v445
        %v670 = vunpack.c.l.b16 %v446
        %v671 = vunpack.c.l.b16 %v447
        %v672 = vunpack.c.l.b16 %v448
        %v673 = vunpack.c.l.b16 %v449
        %v674 = vunpack.c.l.b16 %v450
        %v675 = vunpack.c.l.b16 %v451
        %v676 = vpack.c.b16 %v629, %v628
        %v677 = vpack.c.b16 %v631, %v630
        %v678 = vpack.c.b16 %v633, %v632
        %v679 = vpack.c.b16 %v635, %v634
        %v680 = vpack.c.b16 %v637, %v636
        %v681 = vpack.c.b16 %v639, %v638
        %v682 = vpack.c.b16 %v641, %v640
        %v683 = vpack.c.b16 %v643, %v642
        %v684 = vpack.c.b16 %v645, %v644
        %v685 = vpack.c.b16 %v647, %v646
        %v686 = vpack.c.b16 %v649, %v648
        %v687 = vpack.c.b16 %v651, %v650
        %v688 = vpack.c.b16 %v653, %v652
        %v689 = vpack.c.b16 %v655, %v654
        %v690 = vpack.c.b16 %v657, %v656
        %v691 = vpack.c.b16 %v659, %v658
        %v692 = vpack.c.b16 %v661, %v660
        %v693 = vpack.c.b16 %v663, %v662
        %v694 = vpack.c.b16 %v665, %v664
        %v695 = vpack.c.b16 %v667, %v666
        %v696 = vpack.c.b16 %v669, %v668
        %v697 = vpack.c.b16 %v671, %v670
        %v698 = vpack.c.b16 %v673, %v672
        %v699 = vpack.c.b16 %v675, %v674
        %724 = vmatprep.subr.bf16.mxu0 0
        %725 = vmatpush1.bf16.msra.mxu0 %v676
        %726 = vmatprep.subr.bf16.mxu0 0
        %727 = vmatpush1.bf16.msra.mxu0 %v677
        %728 = vmatprep.subr.bf16.mxu0 0
        %729 = vmatpush1.bf16.msra.mxu0 %v678
        %730 = vmatprep.subr.bf16.mxu0 0
        %731 = vmatpush1.bf16.msra.mxu0 %v679
        %732 = vmatprep.subr.bf16.mxu0 0
        %733 = vmatpush1.bf16.msra.mxu0 %v680
        %734 = vmatprep.subr.bf16.mxu0 0
        %735 = vmatpush1.bf16.msra.mxu0 %v681
        %736 = vmatprep.subr.bf16.mxu0 0
        %737 = vmatpush1.bf16.msra.mxu0 %v682
        %738 = vmatprep.subr.bf16.mxu0 0
        %739 = vmatpush1.bf16.msra.mxu0 %v683
        %740 = vmatprep.subr.bf16.mxu0 0
        %741 = vmatpush1.bf16.msra.mxu0 %v684
        %742 = vmatprep.subr.bf16.mxu0 0
        %743 = vmatpush1.bf16.msra.mxu0 %v685
        %744 = vmatprep.subr.bf16.mxu0 0
        %745 = vmatpush1.bf16.msra.mxu0 %v686
        %746 = vmatprep.subr.bf16.mxu0 0
        %747 = vmatpush1.bf16.msra.mxu0 %v687
        %748 = vmatprep.subr.bf16.mxu0 0
        %749 = vmatpush1.bf16.msra.mxu0 %v688
        %750 = vmatprep.subr.bf16.mxu0 0
        %751 = vmatpush1.bf16.msra.mxu0 %v689
        %752 = vmatprep.subr.bf16.mxu0 0
        %753 = vmatpush1.bf16.msra.mxu0 %v690
        %754 = vmatprep.subr.bf16.mxu0 0
        %755 = vmatpush1.bf16.msra.mxu0 %v691
        %756 = vmatprep.mubr.bf16.mxu0 %v533
        %757 = vmatmul.mubr.bf16.gmra.mrb[0].mxu0 %v532
        %v758 = vpop.f32.mrb[0].mxu0
        %v759 = vadd.f32 0.0, %v758
        %v760 = vpop.f32.mrb[0].mxu0
        %v761 = vpop.f32.mrb[0].mxu0
        %v762 = vadd.f32 0.0, %v761
        %v763 = vpop.f32.mrb[0].mxu0
        %764 = vmatprep.mubr.bf16.mxu0 %v536
        %765 = vmatmul.mubr.bf16.gmra.mrb[0].mxu0 %v535
        %v766 = vpop.f32.mrb[0].mxu0
        %v767 = vadd.f32 0.0, %v766
        %v768 = vpop.f32.mrb[0].mxu0
        %v769 = vpop.f32.mrb[0].mxu0
        %v770 = vadd.f32 0.0, %v769
        %v771 = vpop.f32.mrb[0].mxu0
        %772 = vmatprep.mubr.bf16.mxu0 %v539
        %773 = vmatmul.mubr.bf16.gmra.mrb[0].mxu0 %v538
        %v774 = vpop.f32.mrb[0].mxu0
        %v775 = vadd.f32 0.0, %v774
        %v776 = vpop.f32.mrb[0].mxu0
        %v777 = vpop.f32.mrb[0].mxu0
        %v778 = vadd.f32 0.0, %v777
        %v779 = vpop.f32.mrb[0].mxu0
        %780 = vmatprep.mubr.bf16.mxu0 %v542
        %781 = vmatmul.mubr.bf16.gmra.mrb[0].mxu0 %v541
        %v782 = vpop.f32.mrb[0].mxu0
        %v783 = vadd.f32 0.0, %v782
        %v784 = vpop.f32.mrb[0].mxu0
        %v785 = vpop.f32.mrb[0].mxu0
        %v786 = vadd.f32 0.0, %v785
        %v787 = vpop.f32.mrb[0].mxu0
        %788 = vmatprep.mubr.bf16.mxu0 %v545
        %789 = vmatmul.mubr.bf16.gmra.mrb[0].mxu0 %v544
        %v790 = vpop.f32.mrb[0].mxu0
        %v791 = vadd.f32 0.0, %v790
        %v792 = vpop.f32.mrb[0].mxu0
        %v793 = vpop.f32.mrb[0].mxu0
        %v794 = vadd.f32 0.0, %v793
        %v795 = vpop.f32.mrb[0].mxu0
        %796 = vmatprep.mubr.bf16.mxu0 %v548
        %797 = vmatmul.mubr.bf16.gmra.mrb[0].mxu0 %v547
        %v798 = vpop.f32.mrb[0].mxu0
        %v799 = vadd.f32 0.0, %v798
        %v800 = vpop.f32.mrb[0].mxu0
        %v801 = vpop.f32.mrb[0].mxu0
        %v802 = vadd.f32 0.0, %v801
        %v803 = vpop.f32.mrb[0].mxu0
        %804 = vmatprep.mubr.bf16.mxu0 %v551
        %805 = vmatmul.mubr.bf16.gmra.mrb[0].mxu0 %v550
        %v806 = vpop.f32.mrb[0].mxu0
        %v807 = vadd.f32 0.0, %v806
        %v808 = vpop.f32.mrb[0].mxu0
        %v809 = vpop.f32.mrb[0].mxu0
        %v810 = vadd.f32 0.0, %v809
        %v811 = vpop.f32.mrb[0].mxu0
        %812 = vmatprep.mubr.bf16.mxu0 %v554
        %813 = vmatmul.mubr.bf16.gmra.mrb[0].mxu0 %v553
        %v814 = vpop.f32.mrb[0].mxu0
        %v815 = vadd.f32 0.0, %v814
        %v816 = vpop.f32.mrb[0].mxu0
        %v817 = vpop.f32.mrb[0].mxu0
        %v818 = vadd.f32 0.0, %v817
        %v819 = vpop.f32.mrb[0].mxu0
        %820 = vdwg.mxu0
        %821 = vmatprep.subr.bf16.mxu0 0
        %822 = vmatpush1.bf16.msra.mxu0 %v692
        %823 = vmatprep.subr.bf16.mxu0 0
        %824 = vmatpush1.bf16.msra.mxu0 %v693
        %825 = vmatprep.subr.bf16.mxu0 0
        %826 = vmatpush1.bf16.msra.mxu0 %v694
        %827 = vmatprep.subr.bf16.mxu0 0
        %828 = vmatpush1.bf16.msra.mxu0 %v695
        %829 = vmatprep.subr.bf16.mxu0 0
        %830 = vmatpush1.bf16.msra.mxu0 %v696
        %831 = vmatprep.subr.bf16.mxu0 0
        %832 = vmatpush1.bf16.msra.mxu0 %v697
        %833 = vmatprep.subr.bf16.mxu0 0
        %834 = vmatpush1.bf16.msra.mxu0 %v698
        %835 = vmatprep.subr.bf16.mxu0 0
        %836 = vmatpush1.bf16.msra.mxu0 %v699
        %837 = vmatprep.subr.bf16.mxu0 0
        %838 = vmatpush1.bf16.msra.mxu0 0
        %839 = vmatprep.subr.bf16.mxu0 0
        %840 = vmatpush1.bf16.msra.mxu0 0
        %841 = vmatprep.subr.bf16.mxu0 0
        %842 = vmatpush1.bf16.msra.mxu0 0
        %843 = vmatprep.subr.bf16.mxu0 0
        %844 = vmatpush1.bf16.msra.mxu0 0
        %845 = vmatprep.subr.bf16.mxu0 0
        %846 = vmatpush1.bf16.msra.mxu0 0
        %847 = vmatprep.subr.bf16.mxu0 0
        %848 = vmatpush1.bf16.msra.mxu0 0
        %849 = vmatprep.subr.bf16.mxu0 0
        %850 = vmatpush1.bf16.msra.mxu0 0
        %851 = vmatprep.subr.bf16.mxu0 0
        %852 = vmatpush1.bf16.msra.mxu0 0
        %853 = vmatprep.mubr.bf16.mxu0 0
        %854 = vmatmul.mubr.bf16.gmra.mrb[0].mxu0 %v534
        %v855 = vpop.f32.mrb[0].mxu0
        %v856 = vadd.f32 %v759, %v855
        %v857 = vpop.f32.mrb[0].mxu0
        %v858 = vpop.f32.mrb[0].mxu0
        %v859 = vadd.f32 %v762, %v858
        %v860 = vpop.f32.mrb[0].mxu0
        %861 = vmatprep.mubr.bf16.mxu0 0
        %862 = vmatmul.mubr.bf16.gmra.mrb[0].mxu0 %v537
        %v863 = vpop.f32.mrb[0].mxu0
        %v864 = vadd.f32 %v767, %v863
        %v865 = vpop.f32.mrb[0].mxu0
        %v866 = vpop.f32.mrb[0].mxu0
        %v867 = vadd.f32 %v770, %v866
        %v868 = vpop.f32.mrb[0].mxu0
        %869 = vmatprep.mubr.bf16.mxu0 0
        %870 = vmatmul.mubr.bf16.gmra.mrb[0].mxu0 %v540
        %v871 = vpop.f32.mrb[0].mxu0
        %v872 = vadd.f32 %v775, %v871
        %v873 = vpop.f32.mrb[0].mxu0
        %v874 = vpop.f32.mrb[0].mxu0
        %v875 = vadd.f32 %v778, %v874
        %v876 = vpop.f32.mrb[0].mxu0
        %877 = vmatprep.mubr.bf16.mxu0 0
        %878 = vmatmul.mubr.bf16.gmra.mrb[0].mxu0 %v543
        %v879 = vpop.f32.mrb[0].mxu0
        %v880 = vadd.f32 %v783, %v879
        %v881 = vpop.f32.mrb[0].mxu0
        %v882 = vpop.f32.mrb[0].mxu0
        %v883 = vadd.f32 %v786, %v882
        %v884 = vpop.f32.mrb[0].mxu0
        %885 = vmatprep.mubr.bf16.mxu0 0
        %886 = vmatmul.mubr.bf16.gmra.mrb[0].mxu0 %v546
        %v887 = vpop.f32.mrb[0].mxu0
        %v888 = vadd.f32 %v791, %v887
        %v889 = vpop.f32.mrb[0].mxu0
        %v890 = vpop.f32.mrb[0].mxu0
        %v891 = vadd.f32 %v794, %v890
        %v892 = vpop.f32.mrb[0].mxu0
        %893 = vmatprep.mubr.bf16.mxu0 0
        %894 = vmatmul.mubr.bf16.gmra.mrb[0].mxu0 %v549
        %v895 = vpop.f32.mrb[0].mxu0
        %v896 = vadd.f32 %v799, %v895
        %v897 = vpop.f32.mrb[0].mxu0
        %v898 = vpop.f32.mrb[0].mxu0
        %v899 = vadd.f32 %v802, %v898
        %v900 = vpop.f32.mrb[0].mxu0
        %901 = vmatprep.mubr.bf16.mxu0 0
        %902 = vmatmul.mubr.bf16.gmra.mrb[0].mxu0 %v552
        %v903 = vpop.f32.mrb[0].mxu0
        %v904 = vadd.f32 %v807, %v903
        %v905 = vpop.f32.mrb[0].mxu0
        %v906 = vpop.f32.mrb[0].mxu0
        %v907 = vadd.f32 %v810, %v906
        %v908 = vpop.f32.mrb[0].mxu0
        %909 = vmatprep.mubr.bf16.mxu0 0
        %910 = vmatmul.mubr.bf16.gmra.mrb[0].mxu0 %v555
        %v911 = vpop.f32.mrb[0].mxu0
        %v912 = vadd.f32 %v815, %v911
        %v913 = vpop.f32.mrb[0].mxu0
        %v914 = vpop.f32.mrb[0].mxu0
        %v915 = vadd.f32 %v818, %v914
        %v916 = vpop.f32.mrb[0].mxu0
        %917 = vdwg.mxu0
        %v918 = vld [vmem:[%s3] sm:$0xf]
        %v919 = vld [vmem:[%s3 + $0x4] sm:$0xf]
        %v920 = vld [vmem:[%s3 + $0x8] sm:$0xf]
        %v921 = vld [vmem:[%s3 + $0xc] sm:$0xf]
        %v922 = vld [vmem:[%s3 + $0x10] sm:$0xf]
        %v923 = vld [vmem:[%s3 + $0x14] sm:$0xf]
        %v924 = vld [vmem:[%s3 + $0x18] sm:$0xf]
        %v925 = vld [vmem:[%s3 + $0x1c] sm:$0xf]
        %v926 = vld [vmem:[%s3 + $0x20] sm:$0xf]
        %v927 = vld [vmem:[%s3 + $0x24] sm:$0xf]
        %v928 = vld [vmem:[%s3 + $0x28] sm:$0xf]
        %v929 = vld [vmem:[%s3 + $0x2c] sm:$0xf]
        %v930 = vld [vmem:[%s3 + $0x30] sm:$0xf]
        %v931 = vld [vmem:[%s3 + $0x34] sm:$0xf]
        %v932 = vld [vmem:[%s3 + $0x38] sm:$0xf]
        %v933 = vld [vmem:[%s3 + $0x3c] sm:$0xf]
        %v934 = vld [vmem:[%s3 + $0x40] sm:$0xf]
        %v935 = vld [vmem:[%s3 + $0x44] sm:$0xf]
        %v936 = vld [vmem:[%s3 + $0x48] sm:$0xf]
        %v937 = vld [vmem:[%s3 + $0x4c] sm:$0xf]
        %v938 = vld [vmem:[%s3 + $0x50] sm:$0xf]
        %v939 = vld [vmem:[%s3 + $0x54] sm:$0xf]
        %v940 = vld [vmem:[%s3 + $0x58] sm:$0xf]
        %v941 = vld [vmem:[%s3 + $0x5c] sm:$0xf]
        %v942 = vld [vmem:[%s3 + $0x60] sm:$0xf]
        %v943 = vld [vmem:[%s3 + $0x64] sm:$0xf]
        %v944 = vld [vmem:[%s3 + $0x68] sm:$0xf]
        %v945 = vld [vmem:[%s3 + $0x6c] sm:$0xf]
        %v946 = vld [vmem:[%s3 + $0x70] sm:$0xf]
        %v947 = vld [vmem:[%s3 + $0x74] sm:$0xf]
        %v948 = vld [vmem:[%s3 + $0x78] sm:$0xf]
        %v949 = vld [vmem:[%s3 + $0x7c] sm:$0xf]
        %v950 = vld [vmem:[%s3 + $0x80] sm:$0xf]
        %v951 = vld [vmem:[%s3 + $0x84] sm:$0xf]
        %v952 = vld [vmem:[%s3 + $0x88] sm:$0xf]
        %v953 = vld [vmem:[%s3 + $0x8c] sm:$0xf]
        %v954 = vld [vmem:[%s3 + $0x90] sm:$0xf]
        %v955 = vld [vmem:[%s3 + $0x94] sm:$0xf]
        %v956 = vld [vmem:[%s3 + $0x98] sm:$0xf]
        %v957 = vld [vmem:[%s3 + $0x9c] sm:$0xf]
        %v958 = vld [vmem:[%s3 + $0xa0] sm:$0xf]
        %v959 = vld [vmem:[%s3 + $0xa4] sm:$0xf]
        %v960 = vld [vmem:[%s3 + $0xa8] sm:$0xf]
        %v961 = vld [vmem:[%s3 + $0xac] sm:$0xf]
        %v962 = vld [vmem:[%s3 + $0xb0] sm:$0xf]
        %v963 = vld [vmem:[%s3 + $0xb4] sm:$0xf]
        %v964 = vld [vmem:[%s3 + $0xb8] sm:$0xf]
        %v965 = vld [vmem:[%s3 + $0xbc] sm:$0xf]
        %v1030 = vunpack.c.l.b16 %v340
        %v1031 = vunpack.c.h.b16 %v340
        %v1032 = vunpack.c.l.b16 %v341
        %v1033 = vunpack.c.l.b16 %v342
        %v1034 = vunpack.c.h.b16 %v342
        %v1035 = vunpack.c.l.b16 %v343
        %v1036 = vunpack.c.l.b16 %v344
        %v1037 = vunpack.c.h.b16 %v344
        %v1038 = vunpack.c.l.b16 %v345
        %v1039 = vunpack.c.l.b16 %v346
        %v1040 = vunpack.c.h.b16 %v346
        %v1041 = vunpack.c.l.b16 %v347
        %v1042 = vunpack.c.l.b16 %v348
        %v1043 = vunpack.c.h.b16 %v348
        %v1044 = vunpack.c.l.b16 %v349
        %v1045 = vunpack.c.l.b16 %v350
        %v1046 = vunpack.c.h.b16 %v350
        %v1047 = vunpack.c.l.b16 %v351
        %v1048 = vunpack.c.l.b16 %v352
        %v1049 = vunpack.c.h.b16 %v352
        %v1050 = vunpack.c.l.b16 %v353
        %v1051 = vunpack.c.l.b16 %v354
        %v1052 = vunpack.c.h.b16 %v354
        %v1053 = vunpack.c.l.b16 %v355
        %v1054 = vunpack.c.l.b16 %v356
        %v1055 = vunpack.c.h.b16 %v356
        %v1056 = vunpack.c.l.b16 %v357
        %v1057 = vunpack.c.l.b16 %v358
        %v1058 = vunpack.c.h.b16 %v358
        %v1059 = vunpack.c.l.b16 %v359
        %v1060 = vunpack.c.l.b16 %v360
        %v1061 = vunpack.c.h.b16 %v360
        %v1062 = vunpack.c.l.b16 %v361
        %v1063 = vunpack.c.l.b16 %v362
        %v1064 = vunpack.c.h.b16 %v362
        %v1065 = vunpack.c.l.b16 %v363
        %v1066 = vunpack.c.l.b16 %v364
        %v1067 = vunpack.c.h.b16 %v364
        %v1068 = vunpack.c.l.b16 %v365
        %v1069 = vunpack.c.l.b16 %v366
        %v1070 = vunpack.c.h.b16 %v366
        %v1071 = vunpack.c.l.b16 %v367
        %v1072 = vunpack.c.l.b16 %v368
        %v1073 = vunpack.c.h.b16 %v368
        %v1074 = vunpack.c.l.b16 %v369
        %v1075 = vunpack.c.l.b16 %v370
        %v1076 = vunpack.c.h.b16 %v370
        %v1077 = vunpack.c.l.b16 %v371
        %v1078 = vunpack.c.l.b16 %v372
        %v1079 = vunpack.c.h.b16 %v372
        %v1080 = vunpack.c.l.b16 %v373
        %v1081 = vunpack.c.l.b16 %v374
        %v1082 = vunpack.c.h.b16 %v374
        %v1083 = vunpack.c.l.b16 %v375
        %v1084 = vunpack.c.l.b16 %v376
        %v1085 = vunpack.c.h.b16 %v376
        %v1086 = vunpack.c.l.b16 %v377
        %v1087 = vunpack.c.l.b16 %v378
        %v1088 = vunpack.c.h.b16 %v378
        %v1089 = vunpack.c.l.b16 %v379
        %v1090 = vunpack.c.l.b16 %v380
        %v1091 = vunpack.c.h.b16 %v380
        %v1092 = vunpack.c.l.b16 %v381
        %v1093 = vunpack.c.l.b16 %v382
        %v1094 = vunpack.c.h.b16 %v382
        %v1095 = vunpack.c.l.b16 %v383
        %v1096 = vunpack.c.l.b16 %v384
        %v1097 = vunpack.c.h.b16 %v384
        %v1098 = vunpack.c.l.b16 %v385
        %v1099 = vunpack.c.l.b16 %v386
        %v1100 = vunpack.c.h.b16 %v386
        %v1101 = vunpack.c.l.b16 %v387
        %v1102 = vunpack.c.l.b16 %v388
        %v1103 = vunpack.c.h.b16 %v388
        %v1104 = vunpack.c.l.b16 %v389
        %v1105 = vunpack.c.l.b16 %v390
        %v1106 = vunpack.c.h.b16 %v390
        %v1107 = vunpack.c.l.b16 %v391
        %v1108 = vunpack.c.l.b16 %v392
        %v1109 = vunpack.c.h.b16 %v392
        %v1110 = vunpack.c.l.b16 %v393
        %v1111 = vunpack.c.l.b16 %v394
        %v1112 = vunpack.c.h.b16 %v394
        %v1113 = vunpack.c.l.b16 %v395
        %v1114 = vunpack.c.l.b16 %v396
        %v1115 = vunpack.c.h.b16 %v396
        %v1116 = vunpack.c.l.b16 %v397
        %v1117 = vunpack.c.l.b16 %v398
        %v1118 = vunpack.c.h.b16 %v398
        %v1119 = vunpack.c.l.b16 %v399
        %v1120 = vunpack.c.l.b16 %v400
        %v1121 = vunpack.c.h.b16 %v400
        %v1122 = vunpack.c.l.b16 %v401
        %v1123 = vunpack.c.l.b16 %v402
        %v1124 = vunpack.c.h.b16 %v402
        %v1125 = vunpack.c.l.b16 %v403
        %v1126 = vpack.c.b16 %v1033, %v1030
        %v1127 = vpack.c.b16 %v1034, %v1031
        %v1128 = vpack.c.b16 %v1035, %v1032
        %v1129 = vpack.c.b16 %v1039, %v1036
        %v1130 = vpack.c.b16 %v1040, %v1037
        %v1131 = vpack.c.b16 %v1041, %v1038
        %v1132 = vpack.c.b16 %v1045, %v1042
        %v1133 = vpack.c.b16 %v1046, %v1043
        %v1134 = vpack.c.b16 %v1047, %v1044
        %v1135 = vpack.c.b16 %v1051, %v1048
        %v1136 = vpack.c.b16 %v1052, %v1049
        %v1137 = vpack.c.b16 %v1053, %v1050
        %v1138 = vpack.c.b16 %v1057, %v1054
        %v1139 = vpack.c.b16 %v1058, %v1055
        %v1140 = vpack.c.b16 %v1059, %v1056
        %v1141 = vpack.c.b16 %v1063, %v1060
        %v1142 = vpack.c.b16 %v1064, %v1061
        %v1143 = vpack.c.b16 %v1065, %v1062
        %v1144 = vpack.c.b16 %v1069, %v1066
        %v1145 = vpack.c.b16 %v1070, %v1067
        %v1146 = vpack.c.b16 %v1071, %v1068
        %v1147 = vpack.c.b16 %v1075, %v1072
        %v1148 = vpack.c.b16 %v1076, %v1073
        %v1149 = vpack.c.b16 %v1077, %v1074
        %v1150 = vpack.c.b16 %v1081, %v1078
        %v1151 = vpack.c.b16 %v1082, %v1079
        %v1152 = vpack.c.b16 %v1083, %v1080
        %v1153 = vpack.c.b16 %v1087, %v1084
        %v1154 = vpack.c.b16 %v1088, %v1085
        %v1155 = vpack.c.b16 %v1089, %v1086
        %v1156 = vpack.c.b16 %v1093, %v1090
        %v1157 = vpack.c.b16 %v1094, %v1091
        %v1158 = vpack.c.b16 %v1095, %v1092
        %v1159 = vpack.c.b16 %v1099, %v1096
        %v1160 = vpack.c.b16 %v1100, %v1097
        %v1161 = vpack.c.b16 %v1101, %v1098
        %v1162 = vpack.c.b16 %v1105, %v1102
        %v1163 = vpack.c.b16 %v1106, %v1103
        %v1164 = vpack.c.b16 %v1107, %v1104
        %v1165 = vpack.c.b16 %v1111, %v1108
        %v1166 = vpack.c.b16 %v1112, %v1109
        %v1167 = vpack.c.b16 %v1113, %v1110
        %v1168 = vpack.c.b16 %v1117, %v1114
        %v1169 = vpack.c.b16 %v1118, %v1115
        %v1170 = vpack.c.b16 %v1119, %v1116
        %v1171 = vpack.c.b16 %v1123, %v1120
        %v1172 = vpack.c.b16 %v1124, %v1121
        %v1173 = vpack.c.b16 %v1125, %v1122
        %v1270 = vunpack.c.l.b16 %v918
        %v1271 = vunpack.c.l.b16 %v919
        %v1272 = vunpack.c.l.b16 %v920
        %v1273 = vunpack.c.l.b16 %v921
        %v1274 = vunpack.c.l.b16 %v922
        %v1275 = vunpack.c.l.b16 %v923
        %v1276 = vunpack.c.l.b16 %v924
        %v1277 = vunpack.c.l.b16 %v925
        %v1278 = vunpack.c.l.b16 %v926
        %v1279 = vunpack.c.l.b16 %v927
        %v1280 = vunpack.c.l.b16 %v928
        %v1281 = vunpack.c.l.b16 %v929
        %v1282 = vunpack.c.l.b16 %v930
        %v1283 = vunpack.c.l.b16 %v931
        %v1284 = vunpack.c.l.b16 %v932
        %v1285 = vunpack.c.l.b16 %v933
        %v1286 = vunpack.c.l.b16 %v934
        %v1287 = vunpack.c.l.b16 %v935
        %v1288 = vunpack.c.l.b16 %v936
        %v1289 = vunpack.c.l.b16 %v937
        %v1290 = vunpack.c.l.b16 %v938
        %v1291 = vunpack.c.l.b16 %v939
        %v1292 = vunpack.c.l.b16 %v940
        %v1293 = vunpack.c.l.b16 %v941
        %v1294 = vunpack.c.l.b16 %v942
        %v1295 = vunpack.c.l.b16 %v943
        %v1296 = vunpack.c.l.b16 %v944
        %v1297 = vunpack.c.l.b16 %v945
        %v1298 = vunpack.c.l.b16 %v946
        %v1299 = vunpack.c.l.b16 %v947
        %v1300 = vunpack.c.l.b16 %v948
        %v1301 = vunpack.c.l.b16 %v949
        %v1302 = vunpack.c.l.b16 %v950
        %v1303 = vunpack.c.l.b16 %v951
        %v1304 = vunpack.c.l.b16 %v952
        %v1305 = vunpack.c.l.b16 %v953
        %v1306 = vunpack.c.l.b16 %v954
        %v1307 = vunpack.c.l.b16 %v955
        %v1308 = vunpack.c.l.b16 %v956
        %v1309 = vunpack.c.l.b16 %v957
        %v1310 = vunpack.c.l.b16 %v958
        %v1311 = vunpack.c.l.b16 %v959
        %v1312 = vunpack.c.l.b16 %v960
        %v1313 = vunpack.c.l.b16 %v961
        %v1314 = vunpack.c.l.b16 %v962
        %v1315 = vunpack.c.l.b16 %v963
        %v1316 = vunpack.c.l.b16 %v964
        %v1317 = vunpack.c.l.b16 %v965
        %v1318 = vpack.c.b16 %v1271, %v1270
        %v1319 = vpack.c.b16 %v1273, %v1272
        %v1320 = vpack.c.b16 %v1275, %v1274
        %v1321 = vpack.c.b16 %v1277, %v1276
        %v1322 = vpack.c.b16 %v1279, %v1278
        %v1323 = vpack.c.b16 %v1281, %v1280
        %v1324 = vpack.c.b16 %v1283, %v1282
        %v1325 = vpack.c.b16 %v1285, %v1284
        %v1326 = vpack.c.b16 %v1287, %v1286
        %v1327 = vpack.c.b16 %v1289, %v1288
        %v1328 = vpack.c.b16 %v1291, %v1290
        %v1329 = vpack.c.b16 %v1293, %v1292
        %v1330 = vpack.c.b16 %v1295, %v1294
        %v1331 = vpack.c.b16 %v1297, %v1296
        %v1332 = vpack.c.b16 %v1299, %v1298
        %v1333 = vpack.c.b16 %v1301, %v1300
        %v1334 = vpack.c.b16 %v1303, %v1302
        %v1335 = vpack.c.b16 %v1305, %v1304
        %v1336 = vpack.c.b16 %v1307, %v1306
        %v1337 = vpack.c.b16 %v1309, %v1308
        %v1338 = vpack.c.b16 %v1311, %v1310
        %v1339 = vpack.c.b16 %v1313, %v1312
        %v1340 = vpack.c.b16 %v1315, %v1314
        %v1341 = vpack.c.b16 %v1317, %v1316
        %1366 = vmatprep.subr.bf16.mxu0 0
        %1367 = vmatpush1.bf16.msra.mxu0 %v1318
        %1368 = vmatprep.subr.bf16.mxu0 0
        %1369 = vmatpush1.bf16.msra.mxu0 %v1319
        %1370 = vmatprep.subr.bf16.mxu0 0
        %1371 = vmatpush1.bf16.msra.mxu0 %v1320
        %1372 = vmatprep.subr.bf16.mxu0 0
        %1373 = vmatpush1.bf16.msra.mxu0 %v1321
        %1374 = vmatprep.subr.bf16.mxu0 0
        %1375 = vmatpush1.bf16.msra.mxu0 %v1322
        %1376 = vmatprep.subr.bf16.mxu0 0
        %1377 = vmatpush1.bf16.msra.mxu0 %v1323
        %1378 = vmatprep.subr.bf16.mxu0 0
        %1379 = vmatpush1.bf16.msra.mxu0 %v1324
        %1380 = vmatprep.subr.bf16.mxu0 0
        %1381 = vmatpush1.bf16.msra.mxu0 %v1325
        %1382 = vmatprep.subr.bf16.mxu0 0
        %1383 = vmatpush1.bf16.msra.mxu0 %v1326
        %1384 = vmatprep.subr.bf16.mxu0 0
        %1385 = vmatpush1.bf16.msra.mxu0 %v1327
        %1386 = vmatprep.subr.bf16.mxu0 0
        %1387 = vmatpush1.bf16.msra.mxu0 %v1328
        %1388 = vmatprep.subr.bf16.mxu0 0
        %1389 = vmatpush1.bf16.msra.mxu0 %v1329
        %1390 = vmatprep.subr.bf16.mxu0 0
        %1391 = vmatpush1.bf16.msra.mxu0 %v1330
        %1392 = vmatprep.subr.bf16.mxu0 0
        %1393 = vmatpush1.bf16.msra.mxu0 %v1331
        %1394 = vmatprep.subr.bf16.mxu0 0
        %1395 = vmatpush1.bf16.msra.mxu0 %v1332
        %1396 = vmatprep.subr.bf16.mxu0 0
        %1397 = vmatpush1.bf16.msra.mxu0 %v1333
        %1398 = vmatprep.mubr.bf16.mxu0 %v1127
        %1399 = vmatmul.mubr.bf16.gmra.mrb[0].mxu0 %v1126
        %v1400 = vpop.f32.mrb[0].mxu0
        %v1401 = vadd.f32 0.0, %v1400
        %v1402 = vpop.f32.mrb[0].mxu0
        %v1403 = vpop.f32.mrb[0].mxu0
        %v1404 = vadd.f32 0.0, %v1403
        %v1405 = vpop.f32.mrb[0].mxu0
        %1406 = vmatprep.mubr.bf16.mxu0 %v1130
        %1407 = vmatmul.mubr.bf16.gmra.mrb[0].mxu0 %v1129
        %v1408 = vpop.f32.mrb[0].mxu0
        %v1409 = vadd.f32 0.0, %v1408
        %v1410 = vpop.f32.mrb[0].mxu0
        %v1411 = vpop.f32.mrb[0].mxu0
        %v1412 = vadd.f32 0.0, %v1411
        %v1413 = vpop.f32.mrb[0].mxu0
        %1414 = vmatprep.mubr.bf16.mxu0 %v1133
        %1415 = vmatmul.mubr.bf16.gmra.mrb[0].mxu0 %v1132
        %v1416 = vpop.f32.mrb[0].mxu0
        %v1417 = vadd.f32 0.0, %v1416
        %v1418 = vpop.f32.mrb[0].mxu0
        %v1419 = vpop.f32.mrb[0].mxu0
        %v1420 = vadd.f32 0.0, %v1419
        %v1421 = vpop.f32.mrb[0].mxu0
        %1422 = vmatprep.mubr.bf16.mxu0 %v1136
        %1423 = vmatmul.mubr.bf16.gmra.mrb[0].mxu0 %v1135
        %v1424 = vpop.f32.mrb[0].mxu0
        %v1425 = vadd.f32 0.0, %v1424
        %v1426 = vpop.f32.mrb[0].mxu0
        %v1427 = vpop.f32.mrb[0].mxu0
        %v1428 = vadd.f32 0.0, %v1427
        %v1429 = vpop.f32.mrb[0].mxu0
        %1430 = vmatprep.mubr.bf16.mxu0 %v1139
        %1431 = vmatmul.mubr.bf16.gmra.mrb[0].mxu0 %v1138
        %v1432 = vpop.f32.mrb[0].mxu0
        %v1433 = vadd.f32 0.0, %v1432
        %v1434 = vpop.f32.mrb[0].mxu0
        %v1435 = vpop.f32.mrb[0].mxu0
        %v1436 = vadd.f32 0.0, %v1435
        %v1437 = vpop.f32.mrb[0].mxu0
        %1438 = vmatprep.mubr.bf16.mxu0 %v1142
        %1439 = vmatmul.mubr.bf16.gmra.mrb[0].mxu0 %v1141
        %v1440 = vpop.f32.mrb[0].mxu0
        %v1441 = vadd.f32 0.0, %v1440
        %v1442 = vpop.f32.mrb[0].mxu0
        %v1443 = vpop.f32.mrb[0].mxu0
        %v1444 = vadd.f32 0.0, %v1443
        %v1445 = vpop.f32.mrb[0].mxu0
        %1446 = vmatprep.mubr.bf16.mxu0 %v1145
        %1447 = vmatmul.mubr.bf16.gmra.mrb[0].mxu0 %v1144
        %v1448 = vpop.f32.mrb[0].mxu0
        %v1449 = vadd.f32 0.0, %v1448
        %v1450 = vpop.f32.mrb[0].mxu0
        %v1451 = vpop.f32.mrb[0].mxu0
        %v1452 = vadd.f32 0.0, %v1451
        %v1453 = vpop.f32.mrb[0].mxu0
        %1454 = vmatprep.mubr.bf16.mxu0 %v1148
        %1455 = vmatmul.mubr.bf16.gmra.mrb[0].mxu0 %v1147
        %v1456 = vpop.f32.mrb[0].mxu0
        %v1457 = vadd.f32 0.0, %v1456
        %v1458 = vpop.f32.mrb[0].mxu0
        %v1459 = vpop.f32.mrb[0].mxu0
        %v1460 = vadd.f32 0.0, %v1459
        %v1461 = vpop.f32.mrb[0].mxu0
        %1462 = vmatprep.mubr.bf16.mxu0 %v1151
        %1463 = vmatmul.mubr.bf16.gmra.mrb[0].mxu0 %v1150
        %v1464 = vpop.f32.mrb[0].mxu0
        %v1465 = vadd.f32 0.0, %v1464
        %v1466 = vpop.f32.mrb[0].mxu0
        %v1467 = vpop.f32.mrb[0].mxu0
        %v1468 = vadd.f32 0.0, %v1467
        %v1469 = vpop.f32.mrb[0].mxu0
        %1470 = vmatprep.mubr.bf16.mxu0 %v1154
        %1471 = vmatmul.mubr.bf16.gmra.mrb[0].mxu0 %v1153
        %v1472 = vpop.f32.mrb[0].mxu0
        %v1473 = vadd.f32 0.0, %v1472
        %v1474 = vpop.f32.mrb[0].mxu0
        %v1475 = vpop.f32.mrb[0].mxu0
        %v1476 = vadd.f32 0.0, %v1475
        %v1477 = vpop.f32.mrb[0].mxu0
        %1478 = vmatprep.mubr.bf16.mxu0 %v1157
        %1479 = vmatmul.mubr.bf16.gmra.mrb[0].mxu0 %v1156
        %v1480 = vpop.f32.mrb[0].mxu0
        %v1481 = vadd.f32 0.0, %v1480
        %v1482 = vpop.f32.mrb[0].mxu0
        %v1483 = vpop.f32.mrb[0].mxu0
        %v1484 = vadd.f32 0.0, %v1483
        %v1485 = vpop.f32.mrb[0].mxu0
        %1486 = vmatprep.mubr.bf16.mxu0 %v1160
        %1487 = vmatmul.mubr.bf16.gmra.mrb[0].mxu0 %v1159
        %v1488 = vpop.f32.mrb[0].mxu0
        %v1489 = vadd.f32 0.0, %v1488
        %v1490 = vpop.f32.mrb[0].mxu0
        %v1491 = vpop.f32.mrb[0].mxu0
        %v1492 = vadd.f32 0.0, %v1491
        %v1493 = vpop.f32.mrb[0].mxu0
        %1494 = vmatprep.mubr.bf16.mxu0 %v1163
        %1495 = vmatmul.mubr.bf16.gmra.mrb[0].mxu0 %v1162
        %v1496 = vpop.f32.mrb[0].mxu0
        %v1497 = vadd.f32 0.0, %v1496
        %v1498 = vpop.f32.mrb[0].mxu0
        %v1499 = vpop.f32.mrb[0].mxu0
        %v1500 = vadd.f32 0.0, %v1499
        %v1501 = vpop.f32.mrb[0].mxu0
        %1502 = vmatprep.mubr.bf16.mxu0 %v1166
        %1503 = vmatmul.mubr.bf16.gmra.mrb[0].mxu0 %v1165
        %v1504 = vpop.f32.mrb[0].mxu0
        %v1505 = vadd.f32 0.0, %v1504
        %v1506 = vpop.f32.mrb[0].mxu0
        %v1507 = vpop.f32.mrb[0].mxu0
        %v1508 = vadd.f32 0.0, %v1507
        %v1509 = vpop.f32.mrb[0].mxu0
        %1510 = vmatprep.mubr.bf16.mxu0 %v1169
        %1511 = vmatmul.mubr.bf16.gmra.mrb[0].mxu0 %v1168
        %v1512 = vpop.f32.mrb[0].mxu0
        %v1513 = vadd.f32 0.0, %v1512
        %v1514 = vpop.f32.mrb[0].mxu0
        %v1515 = vpop.f32.mrb[0].mxu0
        %v1516 = vadd.f32 0.0, %v1515
        %v1517 = vpop.f32.mrb[0].mxu0
        %1518 = vmatprep.mubr.bf16.mxu0 %v1172
        %1519 = vmatmul.mubr.bf16.gmra.mrb[0].mxu0 %v1171
        %v1520 = vpop.f32.mrb[0].mxu0
        %v1521 = vadd.f32 0.0, %v1520
        %v1522 = vpop.f32.mrb[0].mxu0
        %v1523 = vpop.f32.mrb[0].mxu0
        %v1524 = vadd.f32 0.0, %v1523
        %v1525 = vpop.f32.mrb[0].mxu0
        %1526 = vdwg.mxu0
        %1527 = vmatprep.subr.bf16.mxu0 0
        %1528 = vmatpush1.bf16.msra.mxu0 %v1334
        %1529 = vmatprep.subr.bf16.mxu0 0
        %1530 = vmatpush1.bf16.msra.mxu0 %v1335
        %1531 = vmatprep.subr.bf16.mxu0 0
        %1532 = vmatpush1.bf16.msra.mxu0 %v1336
        %1533 = vmatprep.subr.bf16.mxu0 0
        %1534 = vmatpush1.bf16.msra.mxu0 %v1337
        %1535 = vmatprep.subr.bf16.mxu0 0
        %1536 = vmatpush1.bf16.msra.mxu0 %v1338
        %1537 = vmatprep.subr.bf16.mxu0 0
        %1538 = vmatpush1.bf16.msra.mxu0 %v1339
        %1539 = vmatprep.subr.bf16.mxu0 0
        %1540 = vmatpush1.bf16.msra.mxu0 %v1340
        %1541 = vmatprep.subr.bf16.mxu0 0
        %1542 = vmatpush1.bf16.msra.mxu0 %v1341
        %1543 = vmatprep.subr.bf16.mxu0 0
        %1544 = vmatpush1.bf16.msra.mxu0 0
        %1545 = vmatprep.subr.bf16.mxu0 0
        %1546 = vmatpush1.bf16.msra.mxu0 0
        %1547 = vmatprep.subr.bf16.mxu0 0
        %1548 = vmatpush1.bf16.msra.mxu0 0
        %1549 = vmatprep.subr.bf16.mxu0 0
        %1550 = vmatpush1.bf16.msra.mxu0 0
        %1551 = vmatprep.subr.bf16.mxu0 0
        %1552 = vmatpush1.bf16.msra.mxu0 0
        %1553 = vmatprep.subr.bf16.mxu0 0
        %1554 = vmatpush1.bf16.msra.mxu0 0
        %1555 = vmatprep.subr.bf16.mxu0 0
        %1556 = vmatpush1.bf16.msra.mxu0 0
        %1557 = vmatprep.subr.bf16.mxu0 0
        %1558 = vmatpush1.bf16.msra.mxu0 0
        %1559 = vmatprep.mubr.bf16.mxu0 0
        %1560 = vmatmul.mubr.bf16.gmra.mrb[0].mxu0 %v1128
        %v1561 = vpop.f32.mrb[0].mxu0
        %v1562 = vadd.f32 %v1401, %v1561
        %v1563 = vpop.f32.mrb[0].mxu0
        %v1564 = vpop.f32.mrb[0].mxu0
        %v1565 = vadd.f32 %v1404, %v1564
        %v1566 = vpop.f32.mrb[0].mxu0
        %1567 = vmatprep.mubr.bf16.mxu0 0
        %1568 = vmatmul.mubr.bf16.gmra.mrb[0].mxu0 %v1131
        %v1569 = vpop.f32.mrb[0].mxu0
        %v1570 = vadd.f32 %v1409, %v1569
        %v1571 = vpop.f32.mrb[0].mxu0
        %v1572 = vpop.f32.mrb[0].mxu0
        %v1573 = vadd.f32 %v1412, %v1572
        %v1574 = vpop.f32.mrb[0].mxu0
        %1575 = vmatprep.mubr.bf16.mxu0 0
        %1576 = vmatmul.mubr.bf16.gmra.mrb[0].mxu0 %v1134
        %v1577 = vpop.f32.mrb[0].mxu0
        %v1578 = vadd.f32 %v1417, %v1577
        %v1579 = vpop.f32.mrb[0].mxu0
        %v1580 = vpop.f32.mrb[0].mxu0
        %v1581 = vadd.f32 %v1420, %v1580
        %v1582 = vpop.f32.mrb[0].mxu0
        %1583 = vmatprep.mubr.bf16.mxu0 0
        %1584 = vmatmul.mubr.bf16.gmra.mrb[0].mxu0 %v1137
        %v1585 = vpop.f32.mrb[0].mxu0
        %v1586 = vadd.f32 %v1425, %v1585
        %v1587 = vpop.f32.mrb[0].mxu0
        %v1588 = vpop.f32.mrb[0].mxu0
        %v1589 = vadd.f32 %v1428, %v1588
        %v1590 = vpop.f32.mrb[0].mxu0
        %1591 = vmatprep.mubr.bf16.mxu0 0
        %1592 = vmatmul.mubr.bf16.gmra.mrb[0].mxu0 %v1140
        %v1593 = vpop.f32.mrb[0].mxu0
        %v1594 = vadd.f32 %v1433, %v1593
        %v1595 = vpop.f32.mrb[0].mxu0
        %v1596 = vpop.f32.mrb[0].mxu0
        %v1597 = vadd.f32 %v1436, %v1596
        %v1598 = vpop.f32.mrb[0].mxu0
        %1599 = vmatprep.mubr.bf16.mxu0 0
        %1600 = vmatmul.mubr.bf16.gmra.mrb[0].mxu0 %v1143
        %v1601 = vpop.f32.mrb[0].mxu0
        %v1602 = vadd.f32 %v1441, %v1601
        %v1603 = vpop.f32.mrb[0].mxu0
        %v1604 = vpop.f32.mrb[0].mxu0
        %v1605 = vadd.f32 %v1444, %v1604
        %v1606 = vpop.f32.mrb[0].mxu0
        %1607 = vmatprep.mubr.bf16.mxu0 0
        %1608 = vmatmul.mubr.bf16.gmra.mrb[0].mxu0 %v1146
        %v1609 = vpop.f32.mrb[0].mxu0
        %v1610 = vadd.f32 %v1449, %v1609
        %v1611 = vpop.f32.mrb[0].mxu0
        %v1612 = vpop.f32.mrb[0].mxu0
        %v1613 = vadd.f32 %v1452, %v1612
        %v1614 = vpop.f32.mrb[0].mxu0
        %1615 = vmatprep.mubr.bf16.mxu0 0
        %1616 = vmatmul.mubr.bf16.gmra.mrb[0].mxu0 %v1149
        %v1617 = vpop.f32.mrb[0].mxu0
        %v1618 = vadd.f32 %v1457, %v1617
        %v1619 = vpop.f32.mrb[0].mxu0
        %v1620 = vpop.f32.mrb[0].mxu0
        %v1621 = vadd.f32 %v1460, %v1620
        %v1622 = vpop.f32.mrb[0].mxu0
        %1623 = vmatprep.mubr.bf16.mxu0 0
        %1624 = vmatmul.mubr.bf16.gmra.mrb[0].mxu0 %v1152
        %v1625 = vpop.f32.mrb[0].mxu0
        %v1626 = vadd.f32 %v1465, %v1625
        %v1627 = vpop.f32.mrb[0].mxu0
        %v1628 = vpop.f32.mrb[0].mxu0
        %v1629 = vadd.f32 %v1468, %v1628
        %v1630 = vpop.f32.mrb[0].mxu0
        %1631 = vmatprep.mubr.bf16.mxu0 0
        %1632 = vmatmul.mubr.bf16.gmra.mrb[0].mxu0 %v1155
        %v1633 = vpop.f32.mrb[0].mxu0
        %v1634 = vadd.f32 %v1473, %v1633
        %v1635 = vpop.f32.mrb[0].mxu0
        %v1636 = vpop.f32.mrb[0].mxu0
        %v1637 = vadd.f32 %v1476, %v1636
        %v1638 = vpop.f32.mrb[0].mxu0
        %1639 = vmatprep.mubr.bf16.mxu0 0
        %1640 = vmatmul.mubr.bf16.gmra.mrb[0].mxu0 %v1158
        %v1641 = vpop.f32.mrb[0].mxu0
        %v1642 = vadd.f32 %v1481, %v1641
        %v1643 = vpop.f32.mrb[0].mxu0
        %v1644 = vpop.f32.mrb[0].mxu0
        %v1645 = vadd.f32 %v1484, %v1644
        %v1646 = vpop.f32.mrb[0].mxu0
        %1647 = vmatprep.mubr.bf16.mxu0 0
        %1648 = vmatmul.mubr.bf16.gmra.mrb[0].mxu0 %v1161
        %v1649 = vpop.f32.mrb[0].mxu0
        %v1650 = vadd.f32 %v1489, %v1649
        %v1651 = vpop.f32.mrb[0].mxu0
        %v1652 = vpop.f32.mrb[0].mxu0
        %v1653 = vadd.f32 %v1492, %v1652
        %v1654 = vpop.f32.mrb[0].mxu0
        %1655 = vmatprep.mubr.bf16.mxu0 0
        %1656 = vmatmul.mubr.bf16.gmra.mrb[0].mxu0 %v1164
        %v1657 = vpop.f32.mrb[0].mxu0
        %v1658 = vadd.f32 %v1497, %v1657
        %v1659 = vpop.f32.mrb[0].mxu0
        %v1660 = vpop.f32.mrb[0].mxu0
        %v1661 = vadd.f32 %v1500, %v1660
        %v1662 = vpop.f32.mrb[0].mxu0
        %1663 = vmatprep.mubr.bf16.mxu0 0
        %1664 = vmatmul.mubr.bf16.gmra.mrb[0].mxu0 %v1167
        %v1665 = vpop.f32.mrb[0].mxu0
        %v1666 = vadd.f32 %v1505, %v1665
        %v1667 = vpop.f32.mrb[0].mxu0
        %v1668 = vpop.f32.mrb[0].mxu0
        %v1669 = vadd.f32 %v1508, %v1668
        %v1670 = vpop.f32.mrb[0].mxu0
        %1671 = vmatprep.mubr.bf16.mxu0 0
        %1672 = vmatmul.mubr.bf16.gmra.mrb[0].mxu0 %v1170
        %v1673 = vpop.f32.mrb[0].mxu0
        %v1674 = vadd.f32 %v1513, %v1673
        %v1675 = vpop.f32.mrb[0].mxu0
        %v1676 = vpop.f32.mrb[0].mxu0
        %v1677 = vadd.f32 %v1516, %v1676
        %v1678 = vpop.f32.mrb[0].mxu0
        %1679 = vmatprep.mubr.bf16.mxu0 0
        %1680 = vmatmul.mubr.bf16.gmra.mrb[0].mxu0 %v1173
        %v1681 = vpop.f32.mrb[0].mxu0
        %v1682 = vadd.f32 %v1521, %v1681
        %v1683 = vpop.f32.mrb[0].mxu0
        %v1684 = vpop.f32.mrb[0].mxu0
        %v1685 = vadd.f32 %v1524, %v1684
        %v1686 = vpop.f32.mrb[0].mxu0
        %1687 = vdwg.mxu0
        %v1688 = vld [vmem:[%s4] sm:$0xf]
        %v1689 = vld [vmem:[%s4 + $0x4] sm:$0xf]
        %v1690 = vld [vmem:[%s4 + $0x8] sm:$0xf]
        %v1691 = vld [vmem:[%s4 + $0xc] sm:$0xf]
        %v1692 = vld [vmem:[%s4 + $0x10] sm:$0xf]
        %v1693 = vld [vmem:[%s4 + $0x14] sm:$0xf]
        %v1694 = vld [vmem:[%s4 + $0x18] sm:$0xf]
        %v1695 = vld [vmem:[%s4 + $0x1c] sm:$0xf]
        %v1696 = vld [vmem:[%s4 + $0x20] sm:$0xf]
        %v1697 = vld [vmem:[%s4 + $0x24] sm:$0xf]
        %v1698 = vld [vmem:[%s4 + $0x28] sm:$0xf]
        %v1699 = vld [vmem:[%s4 + $0x2c] sm:$0xf]
        %v1700 = vld [vmem:[%s4 + $0x30] sm:$0xf]
        %v1701 = vld [vmem:[%s4 + $0x34] sm:$0xf]
        %v1702 = vld [vmem:[%s4 + $0x38] sm:$0xf]
        %v1703 = vld [vmem:[%s4 + $0x3c] sm:$0xf]
        %v1704 = vld [vmem:[%s4 + $0x40] sm:$0xf]
        %v1705 = vld [vmem:[%s4 + $0x44] sm:$0xf]
        %v1706 = vld [vmem:[%s4 + $0x48] sm:$0xf]
        %v1707 = vld [vmem:[%s4 + $0x4c] sm:$0xf]
        %v1708 = vld [vmem:[%s4 + $0x50] sm:$0xf]
        %v1709 = vld [vmem:[%s4 + $0x54] sm:$0xf]
        %v1710 = vld [vmem:[%s4 + $0x58] sm:$0xf]
        %v1711 = vld [vmem:[%s4 + $0x5c] sm:$0xf]
        %v1712 = vld [vmem:[%s4 + $0x60] sm:$0xf]
        %v1713 = vld [vmem:[%s4 + $0x64] sm:$0xf]
        %v1714 = vld [vmem:[%s4 + $0x68] sm:$0xf]
        %v1715 = vld [vmem:[%s4 + $0x6c] sm:$0xf]
        %v1716 = vld [vmem:[%s4 + $0x70] sm:$0xf]
        %v1717 = vld [vmem:[%s4 + $0x74] sm:$0xf]
        %v1718 = vld [vmem:[%s4 + $0x78] sm:$0xf]
        %v1719 = vld [vmem:[%s4 + $0x7c] sm:$0xf]
        %v1720 = vld [vmem:[%s4 + $0x80] sm:$0xf]
        %v1721 = vld [vmem:[%s4 + $0x84] sm:$0xf]
        %v1722 = vld [vmem:[%s4 + $0x88] sm:$0xf]
        %v1723 = vld [vmem:[%s4 + $0x8c] sm:$0xf]
        %v1724 = vld [vmem:[%s4 + $0x90] sm:$0xf]
        %v1725 = vld [vmem:[%s4 + $0x94] sm:$0xf]
        %v1726 = vld [vmem:[%s4 + $0x98] sm:$0xf]
        %v1727 = vld [vmem:[%s4 + $0x9c] sm:$0xf]
        %v1728 = vld [vmem:[%s4 + $0xa0] sm:$0xf]
        %v1729 = vld [vmem:[%s4 + $0xa4] sm:$0xf]
        %v1730 = vld [vmem:[%s4 + $0xa8] sm:$0xf]
        %v1731 = vld [vmem:[%s4 + $0xac] sm:$0xf]
        %v1732 = vld [vmem:[%s4 + $0xb0] sm:$0xf]
        %v1733 = vld [vmem:[%s4 + $0xb4] sm:$0xf]
        %v1734 = vld [vmem:[%s4 + $0xb8] sm:$0xf]
        %v1735 = vld [vmem:[%s4 + $0xbc] sm:$0xf]
        %v1784 = vunpack.c.l.b16 %v1688
        %v1785 = vunpack.c.l.b16 %v1689
        %v1786 = vunpack.c.l.b16 %v1690
        %v1787 = vunpack.c.l.b16 %v1691
        %v1788 = vunpack.c.l.b16 %v1692
        %v1789 = vunpack.c.l.b16 %v1693
        %v1790 = vunpack.c.l.b16 %v1694
        %v1791 = vunpack.c.l.b16 %v1695
        %v1792 = vunpack.c.l.b16 %v1696
        %v1793 = vunpack.c.l.b16 %v1697
        %v1794 = vunpack.c.l.b16 %v1698
        %v1795 = vunpack.c.l.b16 %v1699
        %v1796 = vunpack.c.l.b16 %v1700
        %v1797 = vunpack.c.l.b16 %v1701
        %v1798 = vunpack.c.l.b16 %v1702
        %v1799 = vunpack.c.l.b16 %v1703
        %v1800 = vunpack.c.l.b16 %v1704
        %v1801 = vunpack.c.l.b16 %v1705
        %v1802 = vunpack.c.l.b16 %v1706
        %v1803 = vunpack.c.l.b16 %v1707
        %v1804 = vunpack.c.l.b16 %v1708
        %v1805 = vunpack.c.l.b16 %v1709
        %v1806 = vunpack.c.l.b16 %v1710
        %v1807 = vunpack.c.l.b16 %v1711
        %v1808 = vunpack.c.l.b16 %v1712
        %v1809 = vunpack.c.l.b16 %v1713
        %v1810 = vunpack.c.l.b16 %v1714
        %v1811 = vunpack.c.l.b16 %v1715
        %v1812 = vunpack.c.l.b16 %v1716
        %v1813 = vunpack.c.l.b16 %v1717
        %v1814 = vunpack.c.l.b16 %v1718
        %v1815 = vunpack.c.l.b16 %v1719
        %v1816 = vunpack.c.l.b16 %v1720
        %v1817 = vunpack.c.l.b16 %v1721
        %v1818 = vunpack.c.l.b16 %v1722
        %v1819 = vunpack.c.l.b16 %v1723
        %v1820 = vunpack.c.l.b16 %v1724
        %v1821 = vunpack.c.l.b16 %v1725
        %v1822 = vunpack.c.l.b16 %v1726
        %v1823 = vunpack.c.l.b16 %v1727
        %v1824 = vunpack.c.l.b16 %v1728
        %v1825 = vunpack.c.l.b16 %v1729
        %v1826 = vunpack.c.l.b16 %v1730
        %v1827 = vunpack.c.l.b16 %v1731
        %v1828 = vunpack.c.l.b16 %v1732
        %v1829 = vunpack.c.l.b16 %v1733
        %v1830 = vunpack.c.l.b16 %v1734
        %v1831 = vunpack.c.l.b16 %v1735
        %v1832 = vpack.c.b16 %v1785, %v1784
        %v1833 = vpack.c.b16 %v1787, %v1786
        %v1834 = vpack.c.b16 %v1789, %v1788
        %v1835 = vpack.c.b16 %v1791, %v1790
        %v1836 = vpack.c.b16 %v1793, %v1792
        %v1837 = vpack.c.b16 %v1795, %v1794
        %v1838 = vpack.c.b16 %v1797, %v1796
        %v1839 = vpack.c.b16 %v1799, %v1798
        %v1840 = vpack.c.b16 %v1801, %v1800
        %v1841 = vpack.c.b16 %v1803, %v1802
        %v1842 = vpack.c.b16 %v1805, %v1804
        %v1843 = vpack.c.b16 %v1807, %v1806
        %v1844 = vpack.c.b16 %v1809, %v1808
        %v1845 = vpack.c.b16 %v1811, %v1810
        %v1846 = vpack.c.b16 %v1813, %v1812
        %v1847 = vpack.c.b16 %v1815, %v1814
        %v1848 = vpack.c.b16 %v1817, %v1816
        %v1849 = vpack.c.b16 %v1819, %v1818
        %v1850 = vpack.c.b16 %v1821, %v1820
        %v1851 = vpack.c.b16 %v1823, %v1822
        %v1852 = vpack.c.b16 %v1825, %v1824
        %v1853 = vpack.c.b16 %v1827, %v1826
        %v1854 = vpack.c.b16 %v1829, %v1828
        %v1855 = vpack.c.b16 %v1831, %v1830
        %1880 = vmatprep.subr.bf16.mxu0 0
        %1881 = vmatpush1.bf16.msra.mxu0 %v1832
        %1882 = vmatprep.subr.bf16.mxu0 0
        %1883 = vmatpush1.bf16.msra.mxu0 %v1833
        %1884 = vmatprep.subr.bf16.mxu0 0
        %1885 = vmatpush1.bf16.msra.mxu0 %v1834
        %1886 = vmatprep.subr.bf16.mxu0 0
        %1887 = vmatpush1.bf16.msra.mxu0 %v1835
        %1888 = vmatprep.subr.bf16.mxu0 0
        %1889 = vmatpush1.bf16.msra.mxu0 %v1836
        %1890 = vmatprep.subr.bf16.mxu0 0
        %1891 = vmatpush1.bf16.msra.mxu0 %v1837
        %1892 = vmatprep.subr.bf16.mxu0 0
        %1893 = vmatpush1.bf16.msra.mxu0 %v1838
        %1894 = vmatprep.subr.bf16.mxu0 0
        %1895 = vmatpush1.bf16.msra.mxu0 %v1839
        %1896 = vmatprep.subr.bf16.mxu0 0
        %1897 = vmatpush1.bf16.msra.mxu0 %v1840
        %1898 = vmatprep.subr.bf16.mxu0 0
        %1899 = vmatpush1.bf16.msra.mxu0 %v1841
        %1900 = vmatprep.subr.bf16.mxu0 0
        %1901 = vmatpush1.bf16.msra.mxu0 %v1842
        %1902 = vmatprep.subr.bf16.mxu0 0
        %1903 = vmatpush1.bf16.msra.mxu0 %v1843
        %1904 = vmatprep.subr.bf16.mxu0 0
        %1905 = vmatpush1.bf16.msra.mxu0 %v1844
        %1906 = vmatprep.subr.bf16.mxu0 0
        %1907 = vmatpush1.bf16.msra.mxu0 %v1845
        %1908 = vmatprep.subr.bf16.mxu0 0
        %1909 = vmatpush1.bf16.msra.mxu0 %v1846
        %1910 = vmatprep.subr.bf16.mxu0 0
        %1911 = vmatpush1.bf16.msra.mxu0 %v1847
        %1912 = vmatprep.mubr.bf16.mxu0 %v1127
        %1913 = vmatmul.mubr.bf16.gmra.mrb[0].mxu0 %v1126
        %v1914 = vpop.f32.mrb[0].mxu0
        %v1915 = vadd.f32 0.0, %v1914
        %v1916 = vpop.f32.mrb[0].mxu0
        %v1917 = vpop.f32.mrb[0].mxu0
        %v1918 = vadd.f32 0.0, %v1917
        %v1919 = vpop.f32.mrb[0].mxu0
        %1920 = vmatprep.mubr.bf16.mxu0 %v1130
        %1921 = vmatmul.mubr.bf16.gmra.mrb[0].mxu0 %v1129
        %v1922 = vpop.f32.mrb[0].mxu0
        %v1923 = vadd.f32 0.0, %v1922
        %v1924 = vpop.f32.mrb[0].mxu0
        %v1925 = vpop.f32.mrb[0].mxu0
        %v1926 = vadd.f32 0.0, %v1925
        %v1927 = vpop.f32.mrb[0].mxu0
        %1928 = vmatprep.mubr.bf16.mxu0 %v1133
        %1929 = vmatmul.mubr.bf16.gmra.mrb[0].mxu0 %v1132
        %v1930 = vpop.f32.mrb[0].mxu0
        %v1931 = vadd.f32 0.0, %v1930
        %v1932 = vpop.f32.mrb[0].mxu0
        %v1933 = vpop.f32.mrb[0].mxu0
        %v1934 = vadd.f32 0.0, %v1933
        %v1935 = vpop.f32.mrb[0].mxu0
        %1936 = vmatprep.mubr.bf16.mxu0 %v1136
        %1937 = vmatmul.mubr.bf16.gmra.mrb[0].mxu0 %v1135
        %v1938 = vpop.f32.mrb[0].mxu0
        %v1939 = vadd.f32 0.0, %v1938
        %v1940 = vpop.f32.mrb[0].mxu0
        %v1941 = vpop.f32.mrb[0].mxu0
        %v1942 = vadd.f32 0.0, %v1941
        %v1943 = vpop.f32.mrb[0].mxu0
        %1944 = vmatprep.mubr.bf16.mxu0 %v1139
        %1945 = vmatmul.mubr.bf16.gmra.mrb[0].mxu0 %v1138
        %v1946 = vpop.f32.mrb[0].mxu0
        %v1947 = vadd.f32 0.0, %v1946
        %v1948 = vpop.f32.mrb[0].mxu0
        %v1949 = vpop.f32.mrb[0].mxu0
        %v1950 = vadd.f32 0.0, %v1949
        %v1951 = vpop.f32.mrb[0].mxu0
        %1952 = vmatprep.mubr.bf16.mxu0 %v1142
        %1953 = vmatmul.mubr.bf16.gmra.mrb[0].mxu0 %v1141
        %v1954 = vpop.f32.mrb[0].mxu0
        %v1955 = vadd.f32 0.0, %v1954
        %v1956 = vpop.f32.mrb[0].mxu0
        %v1957 = vpop.f32.mrb[0].mxu0
        %v1958 = vadd.f32 0.0, %v1957
        %v1959 = vpop.f32.mrb[0].mxu0
        %1960 = vmatprep.mubr.bf16.mxu0 %v1145
        %1961 = vmatmul.mubr.bf16.gmra.mrb[0].mxu0 %v1144
        %v1962 = vpop.f32.mrb[0].mxu0
        %v1963 = vadd.f32 0.0, %v1962
        %v1964 = vpop.f32.mrb[0].mxu0
        %v1965 = vpop.f32.mrb[0].mxu0
        %v1966 = vadd.f32 0.0, %v1965
        %v1967 = vpop.f32.mrb[0].mxu0
        %1968 = vmatprep.mubr.bf16.mxu0 %v1148
        %1969 = vmatmul.mubr.bf16.gmra.mrb[0].mxu0 %v1147
        %v1970 = vpop.f32.mrb[0].mxu0
        %v1971 = vadd.f32 0.0, %v1970
        %v1972 = vpop.f32.mrb[0].mxu0
        %v1973 = vpop.f32.mrb[0].mxu0
        %v1974 = vadd.f32 0.0, %v1973
        %v1975 = vpop.f32.mrb[0].mxu0
        %1976 = vmatprep.mubr.bf16.mxu0 %v1151
        %1977 = vmatmul.mubr.bf16.gmra.mrb[0].mxu0 %v1150
        %v1978 = vpop.f32.mrb[0].mxu0
        %v1979 = vadd.f32 0.0, %v1978
        %v1980 = vpop.f32.mrb[0].mxu0
        %v1981 = vpop.f32.mrb[0].mxu0
        %v1982 = vadd.f32 0.0, %v1981
        %v1983 = vpop.f32.mrb[0].mxu0
        %1984 = vmatprep.mubr.bf16.mxu0 %v1154
        %1985 = vmatmul.mubr.bf16.gmra.mrb[0].mxu0 %v1153
        %v1986 = vpop.f32.mrb[0].mxu0
        %v1987 = vadd.f32 0.0, %v1986
        %v1988 = vpop.f32.mrb[0].mxu0
        %v1989 = vpop.f32.mrb[0].mxu0
        %v1990 = vadd.f32 0.0, %v1989
        %v1991 = vpop.f32.mrb[0].mxu0
        %1992 = vmatprep.mubr.bf16.mxu0 %v1157
        %1993 = vmatmul.mubr.bf16.gmra.mrb[0].mxu0 %v1156
        %v1994 = vpop.f32.mrb[0].mxu0
        %v1995 = vadd.f32 0.0, %v1994
        %v1996 = vpop.f32.mrb[0].mxu0
        %v1997 = vpop.f32.mrb[0].mxu0
        %v1998 = vadd.f32 0.0, %v1997
        %v1999 = vpop.f32.mrb[0].mxu0
        %2000 = vmatprep.mubr.bf16.mxu0 %v1160
        %2001 = vmatmul.mubr.bf16.gmra.mrb[0].mxu0 %v1159
        %v2002 = vpop.f32.mrb[0].mxu0
        %v2003 = vadd.f32 0.0, %v2002
        %v2004 = vpop.f32.mrb[0].mxu0
        %v2005 = vpop.f32.mrb[0].mxu0
        %v2006 = vadd.f32 0.0, %v2005
        %v2007 = vpop.f32.mrb[0].mxu0
        %2008 = vmatprep.mubr.bf16.mxu0 %v1163
        %2009 = vmatmul.mubr.bf16.gmra.mrb[0].mxu0 %v1162
        %v2010 = vpop.f32.mrb[0].mxu0
        %v2011 = vadd.f32 0.0, %v2010
        %v2012 = vpop.f32.mrb[0].mxu0
        %v2013 = vpop.f32.mrb[0].mxu0
        %v2014 = vadd.f32 0.0, %v2013
        %v2015 = vpop.f32.mrb[0].mxu0
        %2016 = vmatprep.mubr.bf16.mxu0 %v1166
        %2017 = vmatmul.mubr.bf16.gmra.mrb[0].mxu0 %v1165
        %v2018 = vpop.f32.mrb[0].mxu0
        %v2019 = vadd.f32 0.0, %v2018
        %v2020 = vpop.f32.mrb[0].mxu0
        %v2021 = vpop.f32.mrb[0].mxu0
        %v2022 = vadd.f32 0.0, %v2021
        %v2023 = vpop.f32.mrb[0].mxu0
        %2024 = vmatprep.mubr.bf16.mxu0 %v1169
        %2025 = vmatmul.mubr.bf16.gmra.mrb[0].mxu0 %v1168
        %v2026 = vpop.f32.mrb[0].mxu0
        %v2027 = vadd.f32 0.0, %v2026
        %v2028 = vpop.f32.mrb[0].mxu0
        %v2029 = vpop.f32.mrb[0].mxu0
        %v2030 = vadd.f32 0.0, %v2029
        %v2031 = vpop.f32.mrb[0].mxu0
        %2032 = vmatprep.mubr.bf16.mxu0 %v1172
        %2033 = vmatmul.mubr.bf16.gmra.mrb[0].mxu0 %v1171
        %v2034 = vpop.f32.mrb[0].mxu0
        %v2035 = vadd.f32 0.0, %v2034
        %v2036 = vpop.f32.mrb[0].mxu0
        %v2037 = vpop.f32.mrb[0].mxu0
        %v2038 = vadd.f32 0.0, %v2037
        %v2039 = vpop.f32.mrb[0].mxu0
        %2040 = vdwg.mxu0
        %2041 = vmatprep.subr.bf16.mxu0 0
        %2042 = vmatpush1.bf16.msra.mxu0 %v1848
        %2043 = vmatprep.subr.bf16.mxu0 0
        %2044 = vmatpush1.bf16.msra.mxu0 %v1849
        %2045 = vmatprep.subr.bf16.mxu0 0
        %2046 = vmatpush1.bf16.msra.mxu0 %v1850
        %2047 = vmatprep.subr.bf16.mxu0 0
        %2048 = vmatpush1.bf16.msra.mxu0 %v1851
        %2049 = vmatprep.subr.bf16.mxu0 0
        %2050 = vmatpush1.bf16.msra.mxu0 %v1852
        %2051 = vmatprep.subr.bf16.mxu0 0
        %2052 = vmatpush1.bf16.msra.mxu0 %v1853
        %2053 = vmatprep.subr.bf16.mxu0 0
        %2054 = vmatpush1.bf16.msra.mxu0 %v1854
        %2055 = vmatprep.subr.bf16.mxu0 0
        %2056 = vmatpush1.bf16.msra.mxu0 %v1855
        %2057 = vmatprep.subr.bf16.mxu0 0
        %2058 = vmatpush1.bf16.msra.mxu0 0
        %2059 = vmatprep.subr.bf16.mxu0 0
        %2060 = vmatpush1.bf16.msra.mxu0 0
        %2061 = vmatprep.subr.bf16.mxu0 0
        %2062 = vmatpush1.bf16.msra.mxu0 0
        %2063 = vmatprep.subr.bf16.mxu0 0
        %2064 = vmatpush1.bf16.msra.mxu0 0
        %2065 = vmatprep.subr.bf16.mxu0 0
        %2066 = vmatpush1.bf16.msra.mxu0 0
        %2067 = vmatprep.subr.bf16.mxu0 0
        %2068 = vmatpush1.bf16.msra.mxu0 0
        %2069 = vmatprep.subr.bf16.mxu0 0
        %2070 = vmatpush1.bf16.msra.mxu0 0
        %2071 = vmatprep.subr.bf16.mxu0 0
        %2072 = vmatpush1.bf16.msra.mxu0 0
        %2073 = vmatprep.mubr.bf16.mxu0 0
        %2074 = vmatmul.mubr.bf16.gmra.mrb[0].mxu0 %v1128
        %v2075 = vpop.f32.mrb[0].mxu0
        %v2076 = vadd.f32 %v1915, %v2075
        %v2077 = vpop.f32.mrb[0].mxu0
        %v2078 = vpop.f32.mrb[0].mxu0
        %v2079 = vadd.f32 %v1918, %v2078
        %v2080 = vpop.f32.mrb[0].mxu0
        %2081 = vmatprep.mubr.bf16.mxu0 0
        %2082 = vmatmul.mubr.bf16.gmra.mrb[0].mxu0 %v1131
        %v2083 = vpop.f32.mrb[0].mxu0
        %v2084 = vadd.f32 %v1923, %v2083
        %v2085 = vpop.f32.mrb[0].mxu0
        %v2086 = vpop.f32.mrb[0].mxu0
        %v2087 = vadd.f32 %v1926, %v2086
        %v2088 = vpop.f32.mrb[0].mxu0
        %2089 = vmatprep.mubr.bf16.mxu0 0
        %2090 = vmatmul.mubr.bf16.gmra.mrb[0].mxu0 %v1134
        %v2091 = vpop.f32.mrb[0].mxu0
        %v2092 = vadd.f32 %v1931, %v2091
        %v2093 = vpop.f32.mrb[0].mxu0
        %v2094 = vpop.f32.mrb[0].mxu0
        %v2095 = vadd.f32 %v1934, %v2094
        %v2096 = vpop.f32.mrb[0].mxu0
        %2097 = vmatprep.mubr.bf16.mxu0 0
        %2098 = vmatmul.mubr.bf16.gmra.mrb[0].mxu0 %v1137
        %v2099 = vpop.f32.mrb[0].mxu0
        %v2100 = vadd.f32 %v1939, %v2099
        %v2101 = vpop.f32.mrb[0].mxu0
        %v2102 = vpop.f32.mrb[0].mxu0
        %v2103 = vadd.f32 %v1942, %v2102
        %v2104 = vpop.f32.mrb[0].mxu0
        %2105 = vmatprep.mubr.bf16.mxu0 0
        %2106 = vmatmul.mubr.bf16.gmra.mrb[0].mxu0 %v1140
        %v2107 = vpop.f32.mrb[0].mxu0
        %v2108 = vadd.f32 %v1947, %v2107
        %v2109 = vpop.f32.mrb[0].mxu0
        %v2110 = vpop.f32.mrb[0].mxu0
        %v2111 = vadd.f32 %v1950, %v2110
        %v2112 = vpop.f32.mrb[0].mxu0
        %2113 = vmatprep.mubr.bf16.mxu0 0
        %2114 = vmatmul.mubr.bf16.gmra.mrb[0].mxu0 %v1143
        %v2115 = vpop.f32.mrb[0].mxu0
        %v2116 = vadd.f32 %v1955, %v2115
        %v2117 = vpop.f32.mrb[0].mxu0
        %v2118 = vpop.f32.mrb[0].mxu0
        %v2119 = vadd.f32 %v1958, %v2118
        %v2120 = vpop.f32.mrb[0].mxu0
        %2121 = vmatprep.mubr.bf16.mxu0 0
        %2122 = vmatmul.mubr.bf16.gmra.mrb[0].mxu0 %v1146
        %v2123 = vpop.f32.mrb[0].mxu0
        %v2124 = vadd.f32 %v1963, %v2123
        %v2125 = vpop.f32.mrb[0].mxu0
        %v2126 = vpop.f32.mrb[0].mxu0
        %v2127 = vadd.f32 %v1966, %v2126
        %v2128 = vpop.f32.mrb[0].mxu0
        %2129 = vmatprep.mubr.bf16.mxu0 0
        %2130 = vmatmul.mubr.bf16.gmra.mrb[0].mxu0 %v1149
        %v2131 = vpop.f32.mrb[0].mxu0
        %v2132 = vadd.f32 %v1971, %v2131
        %v2133 = vpop.f32.mrb[0].mxu0
        %v2134 = vpop.f32.mrb[0].mxu0
        %v2135 = vadd.f32 %v1974, %v2134
        %v2136 = vpop.f32.mrb[0].mxu0
        %2137 = vmatprep.mubr.bf16.mxu0 0
        %2138 = vmatmul.mubr.bf16.gmra.mrb[0].mxu0 %v1152
        %v2139 = vpop.f32.mrb[0].mxu0
        %v2140 = vadd.f32 %v1979, %v2139
        %v2141 = vpop.f32.mrb[0].mxu0
        %v2142 = vpop.f32.mrb[0].mxu0
        %v2143 = vadd.f32 %v1982, %v2142
        %v2144 = vpop.f32.mrb[0].mxu0
        %2145 = vmatprep.mubr.bf16.mxu0 0
        %2146 = vmatmul.mubr.bf16.gmra.mrb[0].mxu0 %v1155
        %v2147 = vpop.f32.mrb[0].mxu0
        %v2148 = vadd.f32 %v1987, %v2147
        %v2149 = vpop.f32.mrb[0].mxu0
        %v2150 = vpop.f32.mrb[0].mxu0
        %v2151 = vadd.f32 %v1990, %v2150
        %v2152 = vpop.f32.mrb[0].mxu0
        %2153 = vmatprep.mubr.bf16.mxu0 0
        %2154 = vmatmul.mubr.bf16.gmra.mrb[0].mxu0 %v1158
        %v2155 = vpop.f32.mrb[0].mxu0
        %v2156 = vadd.f32 %v1995, %v2155
        %v2157 = vpop.f32.mrb[0].mxu0
        %v2158 = vpop.f32.mrb[0].mxu0
        %v2159 = vadd.f32 %v1998, %v2158
        %v2160 = vpop.f32.mrb[0].mxu0
        %2161 = vmatprep.mubr.bf16.mxu0 0
        %2162 = vmatmul.mubr.bf16.gmra.mrb[0].mxu0 %v1161
        %v2163 = vpop.f32.mrb[0].mxu0
        %v2164 = vadd.f32 %v2003, %v2163
        %v2165 = vpop.f32.mrb[0].mxu0
        %v2166 = vpop.f32.mrb[0].mxu0
        %v2167 = vadd.f32 %v2006, %v2166
        %v2168 = vpop.f32.mrb[0].mxu0
        %2169 = vmatprep.mubr.bf16.mxu0 0
        %2170 = vmatmul.mubr.bf16.gmra.mrb[0].mxu0 %v1164
        %v2171 = vpop.f32.mrb[0].mxu0
        %v2172 = vadd.f32 %v2011, %v2171
        %v2173 = vpop.f32.mrb[0].mxu0
        %v2174 = vpop.f32.mrb[0].mxu0
        %v2175 = vadd.f32 %v2014, %v2174
        %v2176 = vpop.f32.mrb[0].mxu0
        %2177 = vmatprep.mubr.bf16.mxu0 0
        %2178 = vmatmul.mubr.bf16.gmra.mrb[0].mxu0 %v1167
        %v2179 = vpop.f32.mrb[0].mxu0
        %v2180 = vadd.f32 %v2019, %v2179
        %v2181 = vpop.f32.mrb[0].mxu0
        %v2182 = vpop.f32.mrb[0].mxu0
        %v2183 = vadd.f32 %v2022, %v2182
        %v2184 = vpop.f32.mrb[0].mxu0
        %2185 = vmatprep.mubr.bf16.mxu0 0
        %2186 = vmatmul.mubr.bf16.gmra.mrb[0].mxu0 %v1170
        %v2187 = vpop.f32.mrb[0].mxu0
        %v2188 = vadd.f32 %v2027, %v2187
        %v2189 = vpop.f32.mrb[0].mxu0
        %v2190 = vpop.f32.mrb[0].mxu0
        %v2191 = vadd.f32 %v2030, %v2190
        %v2192 = vpop.f32.mrb[0].mxu0
        %2193 = vmatprep.mubr.bf16.mxu0 0
        %2194 = vmatmul.mubr.bf16.gmra.mrb[0].mxu0 %v1173
        %v2195 = vpop.f32.mrb[0].mxu0
        %v2196 = vadd.f32 %v2035, %v2195
        %v2197 = vpop.f32.mrb[0].mxu0
        %v2198 = vpop.f32.mrb[0].mxu0
        %v2199 = vadd.f32 %v2038, %v2198
        %v2200 = vpop.f32.mrb[0].mxu0
        %2201 = vdwg.mxu0
        %v2202 = vpack.c.bf16 %v859, %v856
        %v2203 = vpack.c.bf16 %v867, %v864
        %v2204 = vpack.c.bf16 %v875, %v872
        %v2205 = vpack.c.bf16 %v883, %v880
        %v2206 = vpack.c.bf16 %v891, %v888
        %v2207 = vpack.c.bf16 %v899, %v896
        %v2208 = vpack.c.bf16 %v907, %v904
        %v2209 = vpack.c.bf16 %v915, %v912
        %v2210 = vpack.c.bf16 %v1565, %v1562
        %v2211 = vpack.c.bf16 %v1573, %v1570
        %v2212 = vpack.c.bf16 %v1581, %v1578
        %v2213 = vpack.c.bf16 %v1589, %v1586
        %v2214 = vpack.c.bf16 %v1597, %v1594
        %v2215 = vpack.c.bf16 %v1605, %v1602
        %v2216 = vpack.c.bf16 %v1613, %v1610
        %v2217 = vpack.c.bf16 %v1621, %v1618
        %v2218 = vpack.c.bf16 %v1629, %v1626
        %v2219 = vpack.c.bf16 %v1637, %v1634
        %v2220 = vpack.c.bf16 %v1645, %v1642
        %v2221 = vpack.c.bf16 %v1653, %v1650
        %v2222 = vpack.c.bf16 %v1661, %v1658
        %v2223 = vpack.c.bf16 %v1669, %v1666
        %v2224 = vpack.c.bf16 %v1677, %v1674
        %v2225 = vpack.c.bf16 %v1685, %v1682
        %vm2226 = vcmask 523264
        %v2228 = vsel %vm2226, %v2202, 0
        %v2231 = vsel %vm2226, %v2203, 0
        %v2234 = vsel %vm2226, %v2204, 0
        %v2237 = vsel %vm2226, %v2205, 0
        %v2240 = vsel %vm2226, %v2206, 0
        %v2243 = vsel %vm2226, %v2207, 0
        %v2246 = vsel %vm2226, %v2208, 0
        %v2249 = vsel %vm2226, %v2209, 0
        %v2252 = vsel %vm2226, %v2210, 0
        %v2255 = vsel %vm2226, %v2211, 0
        %v2258 = vsel %vm2226, %v2212, 0
        %v2261 = vsel %vm2226, %v2213, 0
        %v2264 = vsel %vm2226, %v2214, 0
        %v2267 = vsel %vm2226, %v2215, 0
        %v2270 = vsel %vm2226, %v2216, 0
        %v2273 = vsel %vm2226, %v2217, 0
        %v2276 = vsel %vm2226, %v2218, 0
        %v2279 = vsel %vm2226, %v2219, 0
        %v2282 = vsel %vm2226, %v2220, 0
        %v2285 = vsel %vm2226, %v2221, 0
        %v2288 = vsel %vm2226, %v2222, 0
        %v2291 = vsel %vm2226, %v2223, 0
        %v2294 = vsel %vm2226, %v2224, 0
        %v2297 = vsel %vm2226, %v2225, 0
        %2299 = vmatprep.subr.bf16.mxu0 0
        %2300 = vmatpush1.bf16.xpose.msra.mxu0 %v2252
        %2301 = vmatprep.subr.bf16.mxu0 0
        %2302 = vmatpush1.bf16.xpose.msra.mxu0 %v2255
        %2303 = vmatprep.subr.bf16.mxu0 0
        %2304 = vmatpush1.bf16.xpose.msra.mxu0 %v2258
        %2305 = vmatprep.subr.bf16.mxu0 0
        %2306 = vmatpush1.bf16.xpose.msra.mxu0 %v2261
        %2307 = vmatprep.subr.bf16.mxu0 0
        %2308 = vmatpush1.bf16.xpose.msra.mxu0 %v2264
        %2309 = vmatprep.subr.bf16.mxu0 0
        %2310 = vmatpush1.bf16.xpose.msra.mxu0 %v2267
        %2311 = vmatprep.subr.bf16.mxu0 0
        %2312 = vmatpush1.bf16.xpose.msra.mxu0 %v2270
        %2313 = vmatprep.subr.bf16.mxu0 0
        %2314 = vmatpush1.bf16.xpose.msra.mxu0 %v2273
        %2315 = vmatprep.subr.bf16.mxu0 0
        %2316 = vmatpush1.bf16.xpose.msra.mxu0 %v2276
        %2317 = vmatprep.subr.bf16.mxu0 0
        %2318 = vmatpush1.bf16.xpose.msra.mxu0 %v2279
        %2319 = vmatprep.subr.bf16.mxu0 0
        %2320 = vmatpush1.bf16.xpose.msra.mxu0 %v2282
        %2321 = vmatprep.subr.bf16.mxu0 0
        %2322 = vmatpush1.bf16.xpose.msra.mxu0 %v2285
        %2323 = vmatprep.subr.bf16.mxu0 0
        %2324 = vmatpush1.bf16.xpose.msra.mxu0 %v2288
        %2325 = vmatprep.subr.bf16.mxu0 0
        %2326 = vmatpush1.bf16.xpose.msra.mxu0 %v2291
        %2327 = vmatprep.subr.bf16.mxu0 0
        %2328 = vmatpush1.bf16.xpose.msra.mxu0 %v2294
        %2329 = vmatprep.subr.bf16.mxu0 0
        %2330 = vmatpush1.bf16.xpose.msra.mxu0 %v2297
        %2331 = vmatprep.mubr.bf16.mxu0 0
        %2332 = vmatmul.mubr.bf16.gmra.mrb[0].mxu0 %v2228
        %v2333 = vpop.f32.mrb[0].mxu0
        %v2334 = vadd.f32 0.0, %v2333
        %v2335 = vpop.f32.mrb[0].mxu0
        %v2336 = vadd.f32 0.0, %v2335
        %v2337 = vpop.f32.mrb[0].mxu0
        %v2338 = vadd.f32 0.0, %v2337
        %v2339 = vpop.f32.mrb[0].mxu0
        %v2340 = vadd.f32 0.0, %v2339
        %2341 = vmatprep.mubr.bf16.mxu0 0
        %2342 = vmatmul.mubr.bf16.gmra.mrb[0].mxu0 %v2231
        %v2343 = vpop.f32.mrb[0].mxu0
        %v2344 = vadd.f32 0.0, %v2343
        %v2345 = vpop.f32.mrb[0].mxu0
        %v2346 = vadd.f32 0.0, %v2345
        %v2347 = vpop.f32.mrb[0].mxu0
        %v2348 = vadd.f32 0.0, %v2347
        %v2349 = vpop.f32.mrb[0].mxu0
        %v2350 = vadd.f32 0.0, %v2349
        %2351 = vmatprep.mubr.bf16.mxu0 0
        %2352 = vmatmul.mubr.bf16.gmra.mrb[0].mxu0 %v2234
        %v2353 = vpop.f32.mrb[0].mxu0
        %v2354 = vadd.f32 0.0, %v2353
        %v2355 = vpop.f32.mrb[0].mxu0
        %v2356 = vadd.f32 0.0, %v2355
        %v2357 = vpop.f32.mrb[0].mxu0
        %v2358 = vadd.f32 0.0, %v2357
        %v2359 = vpop.f32.mrb[0].mxu0
        %v2360 = vadd.f32 0.0, %v2359
        %2361 = vmatprep.mubr.bf16.mxu0 0
        %2362 = vmatmul.mubr.bf16.gmra.mrb[0].mxu0 %v2237
        %v2363 = vpop.f32.mrb[0].mxu0
        %v2364 = vadd.f32 0.0, %v2363
        %v2365 = vpop.f32.mrb[0].mxu0
        %v2366 = vadd.f32 0.0, %v2365
        %v2367 = vpop.f32.mrb[0].mxu0
        %v2368 = vadd.f32 0.0, %v2367
        %v2369 = vpop.f32.mrb[0].mxu0
        %v2370 = vadd.f32 0.0, %v2369
        %2371 = vmatprep.mubr.bf16.mxu0 0
        %2372 = vmatmul.mubr.bf16.gmra.mrb[0].mxu0 %v2240
        %v2373 = vpop.f32.mrb[0].mxu0
        %v2374 = vadd.f32 0.0, %v2373
        %v2375 = vpop.f32.mrb[0].mxu0
        %v2376 = vadd.f32 0.0, %v2375
        %v2377 = vpop.f32.mrb[0].mxu0
        %v2378 = vadd.f32 0.0, %v2377
        %v2379 = vpop.f32.mrb[0].mxu0
        %v2380 = vadd.f32 0.0, %v2379
        %2381 = vmatprep.mubr.bf16.mxu0 0
        %2382 = vmatmul.mubr.bf16.gmra.mrb[0].mxu0 %v2243
        %v2383 = vpop.f32.mrb[0].mxu0
        %v2384 = vadd.f32 0.0, %v2383
        %v2385 = vpop.f32.mrb[0].mxu0
        %v2386 = vadd.f32 0.0, %v2385
        %v2387 = vpop.f32.mrb[0].mxu0
        %v2388 = vadd.f32 0.0, %v2387
        %v2389 = vpop.f32.mrb[0].mxu0
        %v2390 = vadd.f32 0.0, %v2389
        %2391 = vmatprep.mubr.bf16.mxu0 0
        %2392 = vmatmul.mubr.bf16.gmra.mrb[0].mxu0 %v2246
        %v2393 = vpop.f32.mrb[0].mxu0
        %v2394 = vadd.f32 0.0, %v2393
        %v2395 = vpop.f32.mrb[0].mxu0
        %v2396 = vadd.f32 0.0, %v2395
        %v2397 = vpop.f32.mrb[0].mxu0
        %v2398 = vadd.f32 0.0, %v2397
        %v2399 = vpop.f32.mrb[0].mxu0
        %v2400 = vadd.f32 0.0, %v2399
        %2401 = vmatprep.mubr.bf16.mxu0 0
        %2402 = vmatmul.mubr.bf16.gmra.mrb[0].mxu0 %v2249
        %v2403 = vpop.f32.mrb[0].mxu0
        %v2404 = vadd.f32 0.0, %v2403
        %v2405 = vpop.f32.mrb[0].mxu0
        %v2406 = vadd.f32 0.0, %v2405
        %v2407 = vpop.f32.mrb[0].mxu0
        %v2408 = vadd.f32 0.0, %v2407
        %v2409 = vpop.f32.mrb[0].mxu0
        %v2410 = vadd.f32 0.0, %v2409
        %2411 = vdwg.mxu0
        %v2412 = vlaneseq
        %v2413 = vshrl.u32 %v2412, 7
        %v2414 = vadd.s32 %v2413, 8
        %v2415 = vadd.s32 %v2413, 16
        %v2416 = vadd.s32 %v2413, 24
        %v2417 = vadd.s32 %v2413, 32
        %v2418 = vadd.s32 %v2413, 40
        %v2419 = vadd.s32 %v2413, 48
        %v2420 = vadd.s32 %v2413, 56
        %v2421 = vadd.s32 %v2413, 64
        %v2422 = vadd.s32 %v2413, 72
        %v2423 = vadd.s32 %v2413, 80
        %v2424 = vadd.s32 %v2413, 88
        %v2425 = vadd.s32 %v2413, 96
        %v2426 = vadd.s32 %v2413, 104
        %v2427 = vadd.s32 %v2413, 112
        %v2428 = vadd.s32 %v2413, 120
        %s2429 = smul.u32 %s24, 128
        %v2430 = vstv %s2429
        %v2431 = vadd.s32 %v2413, %v2430
        %v2432 = vadd.s32 %v2414, %v2430
        %v2433 = vadd.s32 %v2415, %v2430
        %v2434 = vadd.s32 %v2416, %v2430
        %v2435 = vadd.s32 %v2417, %v2430
        %v2436 = vadd.s32 %v2418, %v2430
        %v2437 = vadd.s32 %v2419, %v2430
        %v2438 = vadd.s32 %v2420, %v2430
        %v2439 = vadd.s32 %v2421, %v2430
        %v2440 = vadd.s32 %v2422, %v2430
        %v2441 = vadd.s32 %v2423, %v2430
        %v2442 = vadd.s32 %v2424, %v2430
        %v2443 = vadd.s32 %v2425, %v2430
        %v2444 = vadd.s32 %v2426, %v2430
        %v2445 = vadd.s32 %v2427, %v2430
        %v2446 = vadd.s32 %v2428, %v2430
        %v2447 = vlaneseq
        %v2448 = vand.u32 %v2447, 127
        %v2449 = vadd.s32 %v2448, 128
        %vm2450 = vcmp.le.s32.totalorder %v2448, %v2431
        %vm2451 = vcmp.le.s32.totalorder %v2449, %v2431
        %vm2452 = vcmp.le.s32.totalorder %v2448, %v2432
        %vm2453 = vcmp.le.s32.totalorder %v2449, %v2432
        %vm2454 = vcmp.le.s32.totalorder %v2448, %v2433
        %vm2455 = vcmp.le.s32.totalorder %v2449, %v2433
        %vm2456 = vcmp.le.s32.totalorder %v2448, %v2434
        %vm2457 = vcmp.le.s32.totalorder %v2449, %v2434
        %vm2458 = vcmp.le.s32.totalorder %v2448, %v2435
        %vm2459 = vcmp.le.s32.totalorder %v2449, %v2435
        %vm2460 = vcmp.le.s32.totalorder %v2448, %v2436
        %vm2461 = vcmp.le.s32.totalorder %v2449, %v2436
        %vm2462 = vcmp.le.s32.totalorder %v2448, %v2437
        %vm2463 = vcmp.le.s32.totalorder %v2449, %v2437
        %vm2464 = vcmp.le.s32.totalorder %v2448, %v2438
        %vm2465 = vcmp.le.s32.totalorder %v2449, %v2438
        %vm2466 = vcmp.le.s32.totalorder %v2448, %v2439
        %vm2467 = vcmp.le.s32.totalorder %v2449, %v2439
        %vm2468 = vcmp.le.s32.totalorder %v2448, %v2440
        %vm2469 = vcmp.le.s32.totalorder %v2449, %v2440
        %vm2470 = vcmp.le.s32.totalorder %v2448, %v2441
        %vm2471 = vcmp.le.s32.totalorder %v2449, %v2441
        %vm2472 = vcmp.le.s32.totalorder %v2448, %v2442
        %vm2473 = vcmp.le.s32.totalorder %v2449, %v2442
        %vm2474 = vcmp.le.s32.totalorder %v2448, %v2443
        %vm2475 = vcmp.le.s32.totalorder %v2449, %v2443
        %vm2476 = vcmp.le.s32.totalorder %v2448, %v2444
        %vm2477 = vcmp.le.s32.totalorder %v2449, %v2444
        %vm2478 = vcmp.le.s32.totalorder %v2448, %v2445
        %vm2479 = vcmp.le.s32.totalorder %v2449, %v2445
        %vm2480 = vcmp.le.s32.totalorder %v2448, %v2446
        %vm2481 = vcmp.le.s32.totalorder %v2449, %v2446
        %v2482 = vsel %vm2450, %v2334, -inf
        %v2483 = vsel %vm2451, %v2336, -inf
        %v2484 = vsel %vm2452, %v2338, -inf
        %v2485 = vsel %vm2453, %v2340, -inf
        %v2486 = vsel %vm2454, %v2344, -inf
        %v2487 = vsel %vm2455, %v2346, -inf
        %v2488 = vsel %vm2456, %v2348, -inf
        %v2489 = vsel %vm2457, %v2350, -inf
        %v2490 = vsel %vm2458, %v2354, -inf
        %v2491 = vsel %vm2459, %v2356, -inf
        %v2492 = vsel %vm2460, %v2358, -inf
        %v2493 = vsel %vm2461, %v2360, -inf
        %v2494 = vsel %vm2462, %v2364, -inf
        %v2495 = vsel %vm2463, %v2366, -inf
        %v2496 = vsel %vm2464, %v2368, -inf
        %v2497 = vsel %vm2465, %v2370, -inf
        %v2498 = vsel %vm2466, %v2374, -inf
        %v2499 = vsel %vm2467, %v2376, -inf
        %v2500 = vsel %vm2468, %v2378, -inf
        %v2501 = vsel %vm2469, %v2380, -inf
        %v2502 = vsel %vm2470, %v2384, -inf
        %v2503 = vsel %vm2471, %v2386, -inf
        %v2504 = vsel %vm2472, %v2388, -inf
        %v2505 = vsel %vm2473, %v2390, -inf
        %v2506 = vsel %vm2474, %v2394, -inf
        %v2507 = vsel %vm2475, %v2396, -inf
        %v2508 = vsel %vm2476, %v2398, -inf
        %v2509 = vsel %vm2477, %v2400, -inf
        %v2510 = vsel %vm2478, %v2404, -inf
        %v2511 = vsel %vm2479, %v2406, -inf
        %v2512 = vsel %vm2480, %v2408, -inf
        %v2513 = vsel %vm2481, %v2410, -inf
        %v2514 = vmax.f32 %v2482, %v2483
        %2515 = vmax.xlane.f32.xlu0 %v2514
        %v2516 = vpop.xlane.xlu0 %2515
        %v2517 = vmax.f32 %v2484, %v2485
        %2518 = vmax.xlane.f32.xlu0 %v2517
        %v2519 = vpop.xlane.xlu0 %2518
        %v2520 = vmax.f32 %v2486, %v2487
        %2521 = vmax.xlane.f32.xlu0 %v2520
        %v2522 = vpop.xlane.xlu0 %2521
        %v2523 = vmax.f32 %v2488, %v2489
        %2524 = vmax.xlane.f32.xlu0 %v2523
        %v2525 = vpop.xlane.xlu0 %2524
        %v2526 = vmax.f32 %v2490, %v2491
        %2527 = vmax.xlane.f32.xlu0 %v2526
        %v2528 = vpop.xlane.xlu0 %2527
        %v2529 = vmax.f32 %v2492, %v2493
        %2530 = vmax.xlane.f32.xlu0 %v2529
        %v2531 = vpop.xlane.xlu0 %2530
        %v2532 = vmax.f32 %v2494, %v2495
        %2533 = vmax.xlane.f32.xlu0 %v2532
        %v2534 = vpop.xlane.xlu0 %2533
        %v2535 = vmax.f32 %v2496, %v2497
        %2536 = vmax.xlane.f32.xlu0 %v2535
        %v2537 = vpop.xlane.xlu0 %2536
        %v2538 = vmax.f32 %v2498, %v2499
        %2539 = vmax.xlane.f32.xlu0 %v2538
        %v2540 = vpop.xlane.xlu0 %2539
        %v2541 = vmax.f32 %v2500, %v2501
        %2542 = vmax.xlane.f32.xlu0 %v2541
        %v2543 = vpop.xlane.xlu0 %2542
        %v2544 = vmax.f32 %v2502, %v2503
        %2545 = vmax.xlane.f32.xlu0 %v2544
        %v2546 = vpop.xlane.xlu0 %2545
        %v2547 = vmax.f32 %v2504, %v2505
        %2548 = vmax.xlane.f32.xlu0 %v2547
        %v2549 = vpop.xlane.xlu0 %2548
        %v2550 = vmax.f32 %v2506, %v2507
        %2551 = vmax.xlane.f32.xlu0 %v2550
        %v2552 = vpop.xlane.xlu0 %2551
        %v2553 = vmax.f32 %v2508, %v2509
        %2554 = vmax.xlane.f32.xlu0 %v2553
        %v2555 = vpop.xlane.xlu0 %2554
        %v2556 = vmax.f32 %v2510, %v2511
        %2557 = vmax.xlane.f32.xlu0 %v2556
        %v2558 = vpop.xlane.xlu0 %2557
        %v2559 = vmax.f32 %v2512, %v2513
        %2560 = vmax.xlane.f32.xlu0 %v2559
        %v2561 = vpop.xlane.xlu0 %2560
        %v2562 = vsub.f32 %v2482, %v2516
        %v2563 = vsub.f32 %v2483, %v2516
        %v2564 = vsub.f32 %v2484, %v2519
        %v2565 = vsub.f32 %v2485, %v2519
        %v2566 = vsub.f32 %v2486, %v2522
        %v2567 = vsub.f32 %v2487, %v2522
        %v2568 = vsub.f32 %v2488, %v2525
        %v2569 = vsub.f32 %v2489, %v2525
        %v2570 = vsub.f32 %v2490, %v2528
        %v2571 = vsub.f32 %v2491, %v2528
        %v2572 = vsub.f32 %v2492, %v2531
        %v2573 = vsub.f32 %v2493, %v2531
        %v2574 = vsub.f32 %v2494, %v2534
        %v2575 = vsub.f32 %v2495, %v2534
        %v2576 = vsub.f32 %v2496, %v2537
        %v2577 = vsub.f32 %v2497, %v2537
        %v2578 = vsub.f32 %v2498, %v2540
        %v2579 = vsub.f32 %v2499, %v2540
        %v2580 = vsub.f32 %v2500, %v2543
        %v2581 = vsub.f32 %v2501, %v2543
        %v2582 = vsub.f32 %v2502, %v2546
        %v2583 = vsub.f32 %v2503, %v2546
        %v2584 = vsub.f32 %v2504, %v2549
        %v2585 = vsub.f32 %v2505, %v2549
        %v2586 = vsub.f32 %v2506, %v2552
        %v2587 = vsub.f32 %v2507, %v2552
        %v2588 = vsub.f32 %v2508, %v2555
        %v2589 = vsub.f32 %v2509, %v2555
        %v2590 = vsub.f32 %v2510, %v2558
        %v2591 = vsub.f32 %v2511, %v2558
        %v2592 = vsub.f32 %v2512, %v2561
        %v2593 = vsub.f32 %v2513, %v2561
        %v2594 = vmul.f32 %v2562, 1.442695
        %v2595 = vpow.pop %v2594
        %v2596 = vmul.f32 %v2563, 1.442695
        %v2597 = vpow.pop %v2596
        %v2598 = vmul.f32 %v2564, 1.442695
        %v2599 = vpow.pop %v2598
        %v2600 = vmul.f32 %v2565, 1.442695
        %v2601 = vpow.pop %v2600
        %v2602 = vmul.f32 %v2566, 1.442695
        %v2603 = vpow.pop %v2602
        %v2604 = vmul.f32 %v2567, 1.442695
        %v2605 = vpow.pop %v2604
        %v2606 = vmul.f32 %v2568, 1.442695
        %v2607 = vpow.pop %v2606
        %v2608 = vmul.f32 %v2569, 1.442695
        %v2609 = vpow.pop %v2608
        %v2610 = vmul.f32 %v2570, 1.442695
        %v2611 = vpow.pop %v2610
        %v2612 = vmul.f32 %v2571, 1.442695
        %v2613 = vpow.pop %v2612
        %v2614 = vmul.f32 %v2572, 1.442695
        %v2615 = vpow.pop %v2614
        %v2616 = vmul.f32 %v2573, 1.442695
        %v2617 = vpow.pop %v2616
        %v2618 = vmul.f32 %v2574, 1.442695
        %v2619 = vpow.pop %v2618
        %v2620 = vmul.f32 %v2575, 1.442695
        %v2621 = vpow.pop %v2620
        %v2622 = vmul.f32 %v2576, 1.442695
        %v2623 = vpow.pop %v2622
        %v2624 = vmul.f32 %v2577, 1.442695
        %v2625 = vpow.pop %v2624
        %v2626 = vmul.f32 %v2578, 1.442695
        %v2627 = vpow.pop %v2626
        %v2628 = vmul.f32 %v2579, 1.442695
        %v2629 = vpow.pop %v2628
        %v2630 = vmul.f32 %v2580, 1.442695
        %v2631 = vpow.pop %v2630
        %v2632 = vmul.f32 %v2581, 1.442695
        %v2633 = vpow.pop %v2632
        %v2634 = vmul.f32 %v2582, 1.442695
        %v2635 = vpow.pop %v2634
        %v2636 = vmul.f32 %v2583, 1.442695
        %v2637 = vpow.pop %v2636
        %v2638 = vmul.f32 %v2584, 1.442695
        %v2639 = vpow.pop %v2638
        %v2640 = vmul.f32 %v2585, 1.442695
        %v2641 = vpow.pop %v2640
        %v2642 = vmul.f32 %v2586, 1.442695
        %v2643 = vpow.pop %v2642
        %v2644 = vmul.f32 %v2587, 1.442695
        %v2645 = vpow.pop %v2644
        %v2646 = vmul.f32 %v2588, 1.442695
        %v2647 = vpow.pop %v2646
        %v2648 = vmul.f32 %v2589, 1.442695
        %v2649 = vpow.pop %v2648
        %v2650 = vmul.f32 %v2590, 1.442695
        %v2651 = vpow.pop %v2650
        %v2652 = vmul.f32 %v2591, 1.442695
        %v2653 = vpow.pop %v2652
        %v2654 = vmul.f32 %v2592, 1.442695
        %v2655 = vpow.pop %v2654
        %v2656 = vmul.f32 %v2593, 1.442695
        %v2657 = vpow.pop %v2656
        %v2658 = vadd.f32 %v2595, %v2597
        %2659 = vadd.xlane.f32.xlu0 %v2658
        %v2660 = vpop.xlane.xlu0 %2659
        %v2661 = vadd.f32 %v2599, %v2601
        %2662 = vadd.xlane.f32.xlu0 %v2661
        %v2663 = vpop.xlane.xlu0 %2662
        %v2664 = vadd.f32 %v2603, %v2605
        %2665 = vadd.xlane.f32.xlu0 %v2664
        %v2666 = vpop.xlane.xlu0 %2665
        %v2667 = vadd.f32 %v2607, %v2609
        %2668 = vadd.xlane.f32.xlu0 %v2667
        %v2669 = vpop.xlane.xlu0 %2668
        %v2670 = vadd.f32 %v2611, %v2613
        %2671 = vadd.xlane.f32.xlu0 %v2670
        %v2672 = vpop.xlane.xlu0 %2671
        %v2673 = vadd.f32 %v2615, %v2617
        %2674 = vadd.xlane.f32.xlu0 %v2673
        %v2675 = vpop.xlane.xlu0 %2674
        %v2676 = vadd.f32 %v2619, %v2621
        %2677 = vadd.xlane.f32.xlu0 %v2676
        %v2678 = vpop.xlane.xlu0 %2677
        %v2679 = vadd.f32 %v2623, %v2625
        %2680 = vadd.xlane.f32.xlu0 %v2679
        %v2681 = vpop.xlane.xlu0 %2680
        %v2682 = vadd.f32 %v2627, %v2629
        %2683 = vadd.xlane.f32.xlu0 %v2682
        %v2684 = vpop.xlane.xlu0 %2683
        %v2685 = vadd.f32 %v2631, %v2633
        %2686 = vadd.xlane.f32.xlu0 %v2685
        %v2687 = vpop.xlane.xlu0 %2686
        %v2688 = vadd.f32 %v2635, %v2637
        %2689 = vadd.xlane.f32.xlu0 %v2688
        %v2690 = vpop.xlane.xlu0 %2689
        %v2691 = vadd.f32 %v2639, %v2641
        %2692 = vadd.xlane.f32.xlu0 %v2691
        %v2693 = vpop.xlane.xlu0 %2692
        %v2694 = vadd.f32 %v2643, %v2645
        %2695 = vadd.xlane.f32.xlu0 %v2694
        %v2696 = vpop.xlane.xlu0 %2695
        %v2697 = vadd.f32 %v2647, %v2649
        %2698 = vadd.xlane.f32.xlu0 %v2697
        %v2699 = vpop.xlane.xlu0 %2698
        %v2700 = vadd.f32 %v2651, %v2653
        %2701 = vadd.xlane.f32.xlu0 %v2700
        %v2702 = vpop.xlane.xlu0 %2701
        %v2703 = vadd.f32 %v2655, %v2657
        %2704 = vadd.xlane.f32.xlu0 %v2703
        %v2705 = vpop.xlane.xlu0 %2704
        %v2706 = vrcp.pop %v2660
        %v2707 = vrcp.pop %v2663
        %v2708 = vrcp.pop %v2666
        %v2709 = vrcp.pop %v2669
        %v2710 = vrcp.pop %v2672
        %v2711 = vrcp.pop %v2675
        %v2712 = vrcp.pop %v2678
        %v2713 = vrcp.pop %v2681
        %v2714 = vrcp.pop %v2684
        %v2715 = vrcp.pop %v2687
        %v2716 = vrcp.pop %v2690
        %v2717 = vrcp.pop %v2693
        %v2718 = vrcp.pop %v2696
        %v2719 = vrcp.pop %v2699
        %v2720 = vrcp.pop %v2702
        %v2721 = vrcp.pop %v2705
        %v2722 = vpack.c.bf16 %v2599, %v2595
        %v2723 = vpack.c.bf16 %v2601, %v2597
        %v2724 = vpack.c.bf16 %v2607, %v2603
        %v2725 = vpack.c.bf16 %v2609, %v2605
        %v2726 = vpack.c.bf16 %v2615, %v2611
        %v2727 = vpack.c.bf16 %v2617, %v2613
        %v2728 = vpack.c.bf16 %v2623, %v2619
        %v2729 = vpack.c.bf16 %v2625, %v2621
        %v2730 = vpack.c.bf16 %v2631, %v2627
        %v2731 = vpack.c.bf16 %v2633, %v2629
        %v2732 = vpack.c.bf16 %v2639, %v2635
        %v2733 = vpack.c.bf16 %v2641, %v2637
        %v2734 = vpack.c.bf16 %v2647, %v2643
        %v2735 = vpack.c.bf16 %v2649, %v2645
        %v2736 = vpack.c.bf16 %v2655, %v2651
        %v2737 = vpack.c.bf16 %v2657, %v2653
        %v2738 = vpack.c.bf16 %v2079, %v2076
        %v2739 = vpack.c.bf16 %v2087, %v2084
        %v2740 = vpack.c.bf16 %v2095, %v2092
        %v2741 = vpack.c.bf16 %v2103, %v2100
        %v2742 = vpack.c.bf16 %v2111, %v2108
        %v2743 = vpack.c.bf16 %v2119, %v2116
        %v2744 = vpack.c.bf16 %v2127, %v2124
        %v2745 = vpack.c.bf16 %v2135, %v2132
        %v2746 = vpack.c.bf16 %v2143, %v2140
        %v2747 = vpack.c.bf16 %v2151, %v2148
        %v2748 = vpack.c.bf16 %v2159, %v2156
        %v2749 = vpack.c.bf16 %v2167, %v2164
        %v2750 = vpack.c.bf16 %v2175, %v2172
        %v2751 = vpack.c.bf16 %v2183, %v2180
        %v2752 = vpack.c.bf16 %v2191, %v2188
        %v2753 = vpack.c.bf16 %v2199, %v2196
        %2754 = vmatprep.subr.bf16.mxu0 0
        %2755 = vmatpush1.bf16.msra.mxu0 %v2738
        %2756 = vmatprep.subr.bf16.mxu0 0
        %2757 = vmatpush1.bf16.msra.mxu0 %v2739
        %2758 = vmatprep.subr.bf16.mxu0 0
        %2759 = vmatpush1.bf16.msra.mxu0 %v2740
        %2760 = vmatprep.subr.bf16.mxu0 0
        %2761 = vmatpush1.bf16.msra.mxu0 %v2741
        %2762 = vmatprep.subr.bf16.mxu0 0
        %2763 = vmatpush1.bf16.msra.mxu0 %v2742
        %2764 = vmatprep.subr.bf16.mxu0 0
        %2765 = vmatpush1.bf16.msra.mxu0 %v2743
        %2766 = vmatprep.subr.bf16.mxu0 0
        %2767 = vmatpush1.bf16.msra.mxu0 %v2744
        %2768 = vmatprep.subr.bf16.mxu0 0
        %2769 = vmatpush1.bf16.msra.mxu0 %v2745
        %2770 = vmatprep.subr.bf16.mxu0 0
        %2771 = vmatpush1.bf16.msra.mxu0 %v2746
        %2772 = vmatprep.subr.bf16.mxu0 0
        %2773 = vmatpush1.bf16.msra.mxu0 %v2747
        %2774 = vmatprep.subr.bf16.mxu0 0
        %2775 = vmatpush1.bf16.msra.mxu0 %v2748
        %2776 = vmatprep.subr.bf16.mxu0 0
        %2777 = vmatpush1.bf16.msra.mxu0 %v2749
        %2778 = vmatprep.subr.bf16.mxu0 0
        %2779 = vmatpush1.bf16.msra.mxu0 %v2750
        %2780 = vmatprep.subr.bf16.mxu0 0
        %2781 = vmatpush1.bf16.msra.mxu0 %v2751
        %2782 = vmatprep.subr.bf16.mxu0 0
        %2783 = vmatpush1.bf16.msra.mxu0 %v2752
        %2784 = vmatprep.subr.bf16.mxu0 0
        %2785 = vmatpush1.bf16.msra.mxu0 %v2753
        %2786 = vmatprep.mubr.bf16.mxu0 %v2723
        %2787 = vmatmul.mubr.bf16.gmra.mrb[0].mxu0 %v2722
        %v2788 = vpop.f32.mrb[0].mxu0
        %v2789 = vadd.f32 0.0, %v2788
        %v2790 = vpop.f32.mrb[0].mxu0
        %v2791 = vpop.f32.mrb[0].mxu0
        %v2792 = vadd.f32 0.0, %v2791
        %v2793 = vpop.f32.mrb[0].mxu0
        %2794 = vmatprep.mubr.bf16.mxu0 %v2725
        %2795 = vmatmul.mubr.bf16.gmra.mrb[0].mxu0 %v2724
        %v2796 = vpop.f32.mrb[0].mxu0
        %v2797 = vadd.f32 0.0, %v2796
        %v2798 = vpop.f32.mrb[0].mxu0
        %v2799 = vpop.f32.mrb[0].mxu0
        %v2800 = vadd.f32 0.0, %v2799
        %v2801 = vpop.f32.mrb[0].mxu0
        %2802 = vmatprep.mubr.bf16.mxu0 %v2727
        %2803 = vmatmul.mubr.bf16.gmra.mrb[0].mxu0 %v2726
        %v2804 = vpop.f32.mrb[0].mxu0
        %v2805 = vadd.f32 0.0, %v2804
        %v2806 = vpop.f32.mrb[0].mxu0
        %v2807 = vpop.f32.mrb[0].mxu0
        %v2808 = vadd.f32 0.0, %v2807
        %v2809 = vpop.f32.mrb[0].mxu0
        %2810 = vmatprep.mubr.bf16.mxu0 %v2729
        %2811 = vmatmul.mubr.bf16.gmra.mrb[0].mxu0 %v2728
        %v2812 = vpop.f32.mrb[0].mxu0
        %v2813 = vadd.f32 0.0, %v2812
        %v2814 = vpop.f32.mrb[0].mxu0
        %v2815 = vpop.f32.mrb[0].mxu0
        %v2816 = vadd.f32 0.0, %v2815
        %v2817 = vpop.f32.mrb[0].mxu0
        %2818 = vmatprep.mubr.bf16.mxu0 %v2731
        %2819 = vmatmul.mubr.bf16.gmra.mrb[0].mxu0 %v2730
        %v2820 = vpop.f32.mrb[0].mxu0
        %v2821 = vadd.f32 0.0, %v2820
        %v2822 = vpop.f32.mrb[0].mxu0
        %v2823 = vpop.f32.mrb[0].mxu0
        %v2824 = vadd.f32 0.0, %v2823
        %v2825 = vpop.f32.mrb[0].mxu0
        %2826 = vmatprep.mubr.bf16.mxu0 %v2733
        %2827 = vmatmul.mubr.bf16.gmra.mrb[0].mxu0 %v2732
        %v2828 = vpop.f32.mrb[0].mxu0
        %v2829 = vadd.f32 0.0, %v2828
        %v2830 = vpop.f32.mrb[0].mxu0
        %v2831 = vpop.f32.mrb[0].mxu0
        %v2832 = vadd.f32 0.0, %v2831
        %v2833 = vpop.f32.mrb[0].mxu0
        %2834 = vmatprep.mubr.bf16.mxu0 %v2735
        %2835 = vmatmul.mubr.bf16.gmra.mrb[0].mxu0 %v2734
        %v2836 = vpop.f32.mrb[0].mxu0
        %v2837 = vadd.f32 0.0, %v2836
        %v2838 = vpop.f32.mrb[0].mxu0
        %v2839 = vpop.f32.mrb[0].mxu0
        %v2840 = vadd.f32 0.0, %v2839
        %v2841 = vpop.f32.mrb[0].mxu0
        %2842 = vmatprep.mubr.bf16.mxu0 %v2737
        %2843 = vmatmul.mubr.bf16.gmra.mrb[0].mxu0 %v2736
        %v2844 = vpop.f32.mrb[0].mxu0
        %v2845 = vadd.f32 0.0, %v2844
        %v2846 = vpop.f32.mrb[0].mxu0
        %v2847 = vpop.f32.mrb[0].mxu0
        %v2848 = vadd.f32 0.0, %v2847
        %v2849 = vpop.f32.mrb[0].mxu0
        %2850 = vdwg.mxu0
        %v2851 = vmul.f32 %v2789, %v2706
        %v2852 = vmul.f32 %v2792, %v2707
        %v2853 = vmul.f32 %v2797, %v2708
        %v2854 = vmul.f32 %v2800, %v2709
        %v2855 = vmul.f32 %v2805, %v2710
        %v2856 = vmul.f32 %v2808, %v2711
        %v2857 = vmul.f32 %v2813, %v2712
        %v2858 = vmul.f32 %v2816, %v2713
        %v2859 = vmul.f32 %v2821, %v2714
        %v2860 = vmul.f32 %v2824, %v2715
        %v2861 = vmul.f32 %v2829, %v2716
        %v2862 = vmul.f32 %v2832, %v2717
        %v2863 = vmul.f32 %v2837, %v2718
        %v2864 = vmul.f32 %v2840, %v2719
        %v2865 = vmul.f32 %v2845, %v2720
        %v2866 = vmul.f32 %v2848, %v2721
        %2867 = vst.msk [vmem:[%s305] sm:$0xff] %vm2226, %v2851
        %2868 = vst.msk [vmem:[%s305 + $0x8] sm:$0xff] %vm2226, %v2852
        %2869 = vst.msk [vmem:[%s305 + $0x10] sm:$0xff] %vm2226, %v2853
        %2870 = vst.msk [vmem:[%s305 + $0x18] sm:$0xff] %vm2226, %v2854
        %2871 = vst.msk [vmem:[%s305 + $0x20] sm:$0xff] %vm2226, %v2855
        %2872 = vst.msk [vmem:[%s305 + $0x28] sm:$0xff] %vm2226, %v2856
        %2873 = vst.msk [vmem:[%s305 + $0x30] sm:$0xff] %vm2226, %v2857
        %2874 = vst.msk [vmem:[%s305 + $0x38] sm:$0xff] %vm2226, %v2858
        %2875 = vst.msk [vmem:[%s305 + $0x40] sm:$0xff] %vm2226, %v2859
        %2876 = vst.msk [vmem:[%s305 + $0x48] sm:$0xff] %vm2226, %v2860
        %2877 = vst.msk [vmem:[%s305 + $0x50] sm:$0xff] %vm2226, %v2861
        %2878 = vst.msk [vmem:[%s305 + $0x58] sm:$0xff] %vm2226, %v2862
        %2879 = vst.msk [vmem:[%s305 + $0x60] sm:$0xff] %vm2226, %v2863
        %2880 = vst.msk [vmem:[%s305 + $0x68] sm:$0xff] %vm2226, %v2864
        %2881 = vst.msk [vmem:[%s305 + $0x70] sm:$0xff] %vm2226, %v2865
        %2882 = vst.msk [vmem:[%s305 + $0x78] sm:$0xff] %vm2226, %v2866
        %s2883 = smul.u32 16, %s24
        %p2884 = scmp.lt.s32.totalorder %s23, 1
        %s2885 = scalar_select %p2884, %s23, 1
        %p2886 = scmp.lt.s32.totalorder %s2883, 31
        %s2887 = scalar_select %p2886, %s2883, 31
        %s2888 = smul.addr %s2885, 32
        %s2889 = sadd.s32 %s2887, %s2888
        %s2890 = smul.addr %s2889, 8
        %s2891 = scalar_lea.vmem %s5, %s2890
        // Predicated region
        $region45: #{tpu_custom_call.1} parent=39 // pred_check
          %p2892 = pneg %p168
        $region46: #{tpu_custom_call.1} parent=39 // pred_check_branch
          %2894 = sbr.rel (%p2892) target = $region48
        $region47: #{tpu_custom_call.1} parent=39 // pred_region
          %s2895 = smul.u32 16, %s24
        $region48: #{tpu_custom_call.1} parent=39 // pred_fallthru
          _
      $region40: #{tpu_custom_call.1} parent=5 // pred_fallthru
        _
      %p2896 = scmp.le.s32.totalorder 2, %s14
      // Predicated region
      $region49: #{tpu_custom_call.1} parent=5 // pred_check
        %p2897 = pneg %p2896
      $region50: #{tpu_custom_call.1} parent=5 // pred_check_branch
        %2899 = sbr.rel (%p2897) target = $region52
      $region51: #{tpu_custom_call.1} parent=5 // pred_region
        %s2900 = ssub.s32 %s14, 2
        // Predicated region
        $region53: #{tpu_custom_call.1} parent=51 // pred_check
          %p2901 = pneg %p174
        $region54: #{tpu_custom_call.1} parent=51 // pred_check_branch
          %2903 = sbr.rel (%p2901) target = $region56
        $region55: #{tpu_custom_call.1} parent=51 // pred_region
          %s2904 = smul.u32 16, %s26
          %p2905 = scmp.lt.s32.totalorder %s25, 1
          %s2906 = scalar_select %p2905, %s25, 1
          %p2907 = scmp.lt.s32.totalorder %s2904, 31
          %s2908 = scalar_select %p2907, %s2904, 31
          %s2909 = smul.addr %s2906, 32
          %s2910 = sadd.s32 %s2908, %s2909
          %s2911 = smul.addr %s2910, 8
          %s2912 = scalar_lea.vmem %s5, %s2911
        $region56: #{tpu_custom_call.1} parent=51 // pred_fallthru
          _
      $region52: #{tpu_custom_call.1} parent=5 // pred_fallthru
        _
    $region6: #{tpu_custom_call.1} parent=1 // loop_footer
      %s18 = sadd.s32 1, %s14
    $region7: #{tpu_custom_call.1} parent=1 // loop_footer_branch
      %13 = sbr.rel target = $region3
    $region8: #{tpu_custom_call.1} parent=1 // loop_exit
      _
    %2913 = vsyncpa [#allocation3], 1
    %s2914 = scalar_lea.sflag [#allocation3], 1
    %2915 = vsyncpa %s2914, 1

</llo_original>
